<compile_context>
chip_gen: v7x
topology: tpu7x:2x2x1
jax: 0.10.0
libtpu: 0.0.40
codegen_flags: <defaults>
</compile_context>

<pallas_src>
import numpy as np
import jax
import jax.numpy as jnp
from jax.experimental import pallas as pl
from jax.experimental.pallas import tpu as pltpu


def _fspecial_gauss_1d_np(size: int, sigma: float) -> np.ndarray:
    coords = np.arange(size, dtype=np.float64) - size // 2
    g = np.exp(-coords ** 2 / (2.0 * sigma ** 2))
    return (g / g.sum()).astype(np.float32)


def _round_up(x: int, m: int) -> int:
    return (x + m - 1) // m * m


def make_ssim_pallas(N, C, H, W, *, data_range=255.0, win_size=11,
                     win_sigma=1.5, K=(0.01, 0.03), size_average=True,
                     nonnegative_ssim=False):
    """Builds a jitted SSIM forward specialized to NCHW inputs of this shape."""
    assert win_size % 2 == 1, "Window size should be odd."
    assert H >= win_size and W >= win_size, "spatial dims must be >= win_size"
    # TODO(synk): the 5-D (conv3d / spatial_dims=3) path and the "warn and skip
    # smoothing for dims smaller than the window" path of the PyTorch module
    # are not implemented (asserted away above).

    B = N * C                       # images packed along the sublane axis
    S = 5 * B                       # 5 filter operands (x, y, x^2, y^2, x*y) per image
    Hout = H - win_size + 1
    Wout = W - win_size + 1
    K1, K2 = K
    C1 = float((K1 * data_range) ** 2)
    C2 = float((K2 * data_range) ** 2)
    inv_n = 1.0 / float(Hout * Wout)

    # ---- constants: both 1-D band matrices packed into ONE buffer (one DMA). ----
    g = _fspecial_gauss_1d_np(win_size, win_sigma)
    Gw = np.zeros((W, Wout), np.float32)       # (img @ Gw)[:, o] = sum_k g[k] img[:, o+k]
    for o in range(Wout):
        Gw[o:o + win_size, o] = g
    Gh = np.zeros((Hout, H), np.float32)       # (Gh @ img)[p, :] = sum_k g[k] img[p+k, :]
    for p in range(Hout):
        Gh[p, p:p + win_size] = g
    Wblk = _round_up(W, 8)                     # Gh block starts on an 8-row boundary
    Lc = max(H, Wout)
    const = np.zeros((Wblk + Hout, Lc), np.float32)
    const[0:W, 0:Wout] = Gw
    const[Wblk:Wblk + Hout, 0:H] = Gh
    const_c = jnp.asarray(const)

    # Padding-aware VMEM estimate (lane->128, sublane->8); whole problem stays
    # resident in a single gridless slab at these toy sizes.
    def _pad_f32(*shape):
        lead = int(np.prod(shape[:-2])) if len(shape) > 2 else 1
        return 4 * lead * _round_up(shape[-2], 8) * _round_up(shape[-1], 128)

    vmem_estimate = (
        2 * _pad_f32(B * H, W)            # x, y input tiles
        + _pad_f32(Wblk + Hout, Lc)       # packed constants
        + 2 * _pad_f32(S * H, W)          # ops stack + W-filtered intermediate
        + _pad_f32(S, Hout, H)            # broadcast Gh
        + 12 * _pad_f32(B, Hout, Wout) * 5  # u + elementwise temporaries (generous)
    )
    assert vmem_estimate < 16 * 1024 * 1024, (
        "shape too large for the single-slab SSIM kernel")
    # TODO(synk): realistic H/W/B need H-strip tiling with a (win_size-1)-row
    # halo, a grid over image groups (dimension_semantics=("parallel",...)) so
    # v7x's two TensorCores both work, and an explicit vmem_limit_bytes budget.

    def ssim_kernel(x_ref, y_ref, c_ref, out_ref):
        # In-kernel cast: inputs arrive in the caller's dtype (no wrapper HLO).
        x = x_ref[...].astype(jnp.float32)                     # (B*H, W)
        y = y_ref[...].astype(jnp.float32)
        gw = c_ref[0:W, 0:Wout]                                # (W, Wout), offset 0
        gh = c_ref[Wblk:Wblk + Hout, 0:H]                      # (Hout, H), 8-aligned offset

        # Five filter operands stacked along the (8-aligned) sublane axis.
        ops = jnp.concatenate([x, y, x * x, y * y, x * y], axis=0)    # (S*H, W)

        # W-direction valid Gaussian: one shared band matrix, one MXU matmul.
        t = jnp.dot(ops, gw, preferred_element_type=jnp.float32)      # (S*H, Wout)

        # H-direction: per-image batched contraction (no kron block diagonals).
        # TODO(synk): for H not a multiple of 8 this reshape may pay a relayout.
        t3 = t.reshape(S, H, Wout)                                     # aligned split
        gh_b = jnp.broadcast_to(gh[None], (S, Hout, H))
        u = jnp.einsum("sph,shw->spw", gh_b, t3,
                       preferred_element_type=jnp.float32)             # (S, Hout, Wout)

        # Operand blocks live in the leading dim -> tile-aligned free slices.
        mu1, mu2 = u[0 * B:1 * B], u[1 * B:2 * B]
        exx, eyy, exy = u[2 * B:3 * B], u[3 * B:4 * B], u[4 * B:5 * B]
        mu1_sq = mu1 * mu1
        mu2_sq = mu2 * mu2
        mu1_mu2 = mu1 * mu2
        sigma1_sq = exx - mu1_sq
        sigma2_sq = eyy - mu2_sq
        sigma12 = exy - mu1_mu2
        num = (2.0 * mu1_mu2 + C1) * (2.0 * sigma12 + C2)
        den = (mu1_sq + mu2_sq + C1) * (sigma1_sq + sigma2_sq + C2)
        ssim_map = num * pl.reciprocal(den, approx=True)                # (B, Hout, Wout)

        # Per-image spatial mean, then (optionally) fold relu + batch mean.
        per_img = jnp.sum(jnp.sum(ssim_map, axis=2, keepdims=True),
                          axis=1, keepdims=True) * inv_n                # (B, 1, 1)
        if nonnegative_ssim:
            per_img = jnp.maximum(per_img, 0.0)
        if size_average:
            out_ref[...] = jnp.sum(per_img, axis=0, keepdims=True) * (1.0 / B)
        else:
            out_ref[...] = per_img

    vmem = pl.BlockSpec(memory_space=pltpu.MemorySpace.VMEM)
    out_shape = (1, 1, 1) if size_average else (B, 1, 1)
    ssim_call = pl.pallas_call(
        ssim_kernel,
        out_shape=jax.ShapeDtypeStruct(out_shape, jnp.float32),
        in_specs=[vmem, vmem, vmem],
        out_specs=vmem,
    )

    def forward(X, Y):
        assert X.shape == (N, C, H, W) and Y.shape == (N, C, H, W)
        # Free contiguous views: (N,C,H,W) -> (N*C*H, W); no transpose, no cast.
        xr = X.reshape(B * H, W)
        yr = Y.reshape(B * H, W)
        out = ssim_call(xr, yr, const_c)
        if size_average:
            return out.reshape(())            # relu + mean already folded in-kernel
        per_channel = out.reshape(N, C)       # relu (if any) already applied in-kernel
        return jnp.mean(per_channel, axis=1)

    return jax.jit(forward)


def _ssim_reference(X, Y, *, data_range=255.0, win_size=11, win_sigma=1.5,
                    K=(0.01, 0.03)):
    """Pure-JAX reference (elementwise only, no matmul) for correctness check."""
    g = jnp.asarray(_fspecial_gauss_1d_np(win_size, win_sigma))
    Hout = X.shape[2] - win_size + 1
    Wout = X.shape[3] - win_size + 1

    def gfilt(img):
        v = sum(g[k] * img[:, :, k:k + Hout, :] for k in range(win_size))
        o = sum(g[k] * v[:, :, :, k:k + Wout] for k in range(win_size))
        return o

    K1, K2 = K
    C1 = (K1 * data_range) ** 2
    C2 = (K2 * data_range) ** 2
    mu1, mu2 = gfilt(X), gfilt(Y)
    s11 = gfilt(X * X) - mu1 * mu1
    s22 = gfilt(Y * Y) - mu2 * mu2
    s12 = gfilt(X * Y) - mu1 * mu2
    cs_map = (2 * s12 + C2) / (s11 + s22 + C2)
    ssim_map = (2 * mu1 * mu2 + C1) / (mu1 * mu1 + mu2 * mu2 + C1) * cs_map
    return jnp.mean(jnp.mean(ssim_map.reshape(X.shape[0], X.shape[1], -1), -1))


if __name__ == "__main__":
    N, Cch, H, W = 2, 3, 16, 16   # module defaults: channel=3, spatial_dims=2

    key = jax.random.PRNGKey(0)
    kx, kn = jax.random.split(key)
    X = jax.random.uniform(kx, (N, Cch, H, W), jnp.float32, 0.0, 255.0)
    noise = 20.0 * jax.random.normal(kn, (N, Cch, H, W), jnp.float32)
    Y = jnp.clip(X + noise, 0.0, 255.0)   # correlated pair -> mid/high SSIM

    ssim_fn = make_ssim_pallas(N, Cch, H, W, data_range=255.0,
                               win_size=11, win_sigma=1.5,
                               K=(0.01, 0.03), size_average=True)

    out = jax.block_until_ready(ssim_fn(X, Y))
    ref = jax.block_until_ready(_ssim_reference(X, Y))

    assert np.isfinite(float(out)), "non-finite SSIM output"
    # Tolerance sized for the EUP approximate reciprocal (~2^-12 rel err) used
    # for the ssim_map divide; with an exact divide agreement is ~1e-6.
    assert np.allclose(float(out), float(ref), rtol=1e-3, atol=1e-3), (
        f"mismatch: pallas={float(out)} ref={float(ref)}")

    print("KERNEL_OK")
</pallas_src>

<mosaic_0001>
module attributes {stable_mosaic.version = 11 : i64} {
  func.func @ssim_kernel(%arg0: memref<96x16xf32, #tpu.memory_space<vmem>>, %arg1: memref<96x16xf32, #tpu.memory_space<vmem>>, %arg2: memref<22x16xf32, #tpu.memory_space<vmem>>, %arg3: memref<1x1x1xf32, #tpu.memory_space<vmem>>) attributes {dimension_semantics = [], scalar_prefetch = 0 : i64, scratch_operands = 0 : i64, tpu.core_type = #tpu.core_type<tc>} {
    %c0 = arith.constant 0 : index
    %c0_0 = arith.constant 0 : index
    %0 = vector.load %arg0[%c0, %c0_0] : memref<96x16xf32, #tpu.memory_space<vmem>>, vector<96x16xf32>
    %c0_1 = arith.constant 0 : index
    %c0_2 = arith.constant 0 : index
    %1 = vector.load %arg1[%c0_1, %c0_2] : memref<96x16xf32, #tpu.memory_space<vmem>>, vector<96x16xf32>
    %c0_3 = arith.constant 0 : index
    %c0_4 = arith.constant 0 : index
    %2 = vector.load %arg2[%c0_3, %c0_4] : memref<22x16xf32, #tpu.memory_space<vmem>>, vector<16x6xf32>
    %c16 = arith.constant 16 : index
    %c0_5 = arith.constant 0 : index
    %3 = vector.load %arg2[%c16, %c0_5] : memref<22x16xf32, #tpu.memory_space<vmem>>, vector<6x16xf32>
    %4 = arith.mulf %0, %0 : vector<96x16xf32>
    %5 = arith.mulf %1, %1 : vector<96x16xf32>
    %6 = arith.mulf %0, %1 : vector<96x16xf32>
    %7 = tpu.concatenate %0, %1, %4, %5, %6 in 0 : vector<96x16xf32>, vector<96x16xf32>, vector<96x16xf32>, vector<96x16xf32>, vector<96x16xf32> -> vector<480x16xf32>
    %cst = arith.constant dense<0.000000e+00> : vector<480x6xf32>
    %8 = tpu.matmul %7, %2, %cst {dimension_numbers = #tpu.dot_dimension_numbers<[1], [0], [0], [1], [0, 0, 1, 1], [], []>} : vector<480x16xf32>, vector<16x6xf32>, vector<480x6xf32> -> vector<480x6xf32>
    %9 = vector.shape_cast %8 : vector<480x6xf32> to vector<30x16x6xf32>
    %10 = vector.shape_cast %3 : vector<6x16xf32> to vector<1x6x16xf32>
    %11 = vector.shape_cast %10 : vector<1x6x16xf32> to vector<1x6x16xf32>
    %12 = vector.broadcast %11 : vector<1x6x16xf32> to vector<30x6x16xf32>
    "tpu.trace_start"() <{level = 10 : i32, message = "sph,shw->spw"}> : () -> ()
    %cst_6 = arith.constant dense<0.000000e+00> : vector<30x6x6xf32>
    %13 = tpu.matmul %12, %9, %cst_6 {dimension_numbers = #tpu.dot_dimension_numbers<[2], [1], [1], [2], [0, 0, 0, 1, 1, 2], [0], [0]>} : vector<30x6x16xf32>, vector<30x16x6xf32>, vector<30x6x6xf32> -> vector<30x6x6xf32>
    "tpu.trace_stop"() : () -> ()
    %14 = vector.extract_strided_slice %13 {offsets = [0, 0, 0], sizes = [6, 6, 6], strides = [1, 1, 1]} : vector<30x6x6xf32> to vector<6x6x6xf32>
    %15 = vector.extract_strided_slice %13 {offsets = [6, 0, 0], sizes = [6, 6, 6], strides = [1, 1, 1]} : vector<30x6x6xf32> to vector<6x6x6xf32>
    %16 = vector.extract_strided_slice %13 {offsets = [12, 0, 0], sizes = [6, 6, 6], strides = [1, 1, 1]} : vector<30x6x6xf32> to vector<6x6x6xf32>
    %17 = vector.extract_strided_slice %13 {offsets = [18, 0, 0], sizes = [6, 6, 6], strides = [1, 1, 1]} : vector<30x6x6xf32> to vector<6x6x6xf32>
    %18 = vector.extract_strided_slice %13 {offsets = [24, 0, 0], sizes = [6, 6, 6], strides = [1, 1, 1]} : vector<30x6x6xf32> to vector<6x6x6xf32>
    %19 = arith.mulf %14, %14 : vector<6x6x6xf32>
    %20 = arith.mulf %15, %15 : vector<6x6x6xf32>
    %21 = arith.mulf %14, %15 : vector<6x6x6xf32>
    %22 = arith.subf %16, %19 : vector<6x6x6xf32>
    %23 = arith.subf %17, %20 : vector<6x6x6xf32>
    %24 = arith.subf %18, %21 : vector<6x6x6xf32>
    %cst_7 = arith.constant 2.000000e+00 : f32
    %25 = vector.broadcast %cst_7 : f32 to vector<6x6x6xf32>
    %26 = arith.mulf %25, %21 : vector<6x6x6xf32>
    %cst_8 = arith.constant 6.502500e+00 : f32
    %27 = vector.broadcast %cst_8 : f32 to vector<6x6x6xf32>
    %28 = arith.addf %26, %27 : vector<6x6x6xf32>
    %cst_9 = arith.constant 2.000000e+00 : f32
    %29 = vector.broadcast %cst_9 : f32 to vector<6x6x6xf32>
    %30 = arith.mulf %29, %24 : vector<6x6x6xf32>
    %cst_10 = arith.constant 5.852250e+01 : f32
    %31 = vector.broadcast %cst_10 : f32 to vector<6x6x6xf32>
    %32 = arith.addf %30, %31 : vector<6x6x6xf32>
    %33 = arith.mulf %28, %32 : vector<6x6x6xf32>
    %34 = arith.addf %19, %20 : vector<6x6x6xf32>
    %cst_11 = arith.constant 6.502500e+00 : f32
    %35 = vector.broadcast %cst_11 : f32 to vector<6x6x6xf32>
    %36 = arith.addf %34, %35 : vector<6x6x6xf32>
    %37 = arith.addf %22, %23 : vector<6x6x6xf32>
    %cst_12 = arith.constant 5.852250e+01 : f32
    %38 = vector.broadcast %cst_12 : f32 to vector<6x6x6xf32>
    %39 = arith.addf %37, %38 : vector<6x6x6xf32>
    %40 = arith.mulf %36, %39 : vector<6x6x6xf32>
    %41 = tpu.reciprocal %40 {approx = true} : vector<6x6x6xf32> -> vector<6x6x6xf32>
    %42 = arith.mulf %33, %41 : vector<6x6x6xf32>
    %cst_13 = arith.constant dense<0.000000e+00> : vector<6x6xf32>
    %43 = vector.multi_reduction <add>, %42, %cst_13 [2] : vector<6x6x6xf32> to vector<6x6xf32>
    %44 = vector.shape_cast %43 : vector<6x6xf32> to vector<6x6x1xf32>
    %cst_14 = arith.constant dense<0.000000e+00> : vector<6x1xf32>
    %45 = vector.multi_reduction <add>, %44, %cst_14 [1] : vector<6x6x1xf32> to vector<6x1xf32>
    %46 = vector.shape_cast %45 : vector<6x1xf32> to vector<6x1x1xf32>
    %cst_15 = arith.constant 0.027777778 : f32
    %47 = vector.broadcast %cst_15 : f32 to vector<6x1x1xf32>
    %48 = arith.mulf %46, %47 : vector<6x1x1xf32>
    %cst_16 = arith.constant dense<0.000000e+00> : vector<1x1xf32>
    %49 = vector.multi_reduction <add>, %48, %cst_16 [0] : vector<6x1x1xf32> to vector<1x1xf32>
    %50 = vector.shape_cast %49 : vector<1x1xf32> to vector<1x1x1xf32>
    %cst_17 = arith.constant 0.166666672 : f32
    %51 = vector.broadcast %cst_17 : f32 to vector<1x1x1xf32>
    %52 = arith.mulf %50, %51 : vector<1x1x1xf32>
    %c0_18 = arith.constant 0 : index
    %c0_19 = arith.constant 0 : index
    %c0_20 = arith.constant 0 : index
    %53 = vector.load %arg3[%c0_18, %c0_19, %c0_20] : memref<1x1x1xf32, #tpu.memory_space<vmem>>, vector<1x1x1xf32>
    tpu.vector_store %arg3[%c0_18, %c0_19, %c0_20], %52 {strides = array<i32>} : memref<1x1x1xf32, #tpu.memory_space<vmem>>, vector<1x1x1xf32>,
    return
  }
}

</mosaic_0001>

<llo_original>
// kernel: forward.1
$region0: #{forward.1}
  #allocation0 [shape = 'u32[]', space=smem, size = 0x4, offset = 0x4, fixed_abs, tag = 'smem constant byte address 0x4 - core index']
  #allocation1 [shape = 'u32[144,128]{1,0:T(1,128)}', space=vmem, size = 0x12000, scoped, tag = 'internal scratch']
  %s0 = inlined_call_operand.hbm [shape: f32[96,16], index: 0, kind: input, shape index: {}]
  %s1 = inlined_call_operand.hbm [shape: f32[96,16], index: 1, kind: input, shape index: {}]
  %s2 = inlined_call_operand.hbm [shape: f32[22,16], index: 2, kind: input, shape index: {}]
  %s3 = inlined_call_operand.hbm [shape: f32[1,1,1], index: 3, kind: output, shape index: {}]
  %s4 = sld [smem:[#allocation0]]
  $region34: #{forward.1} parent=0
    _
  %s6 = ssub.s32 1, %s4
  %s7 = scalar_select 0, %s6, %s4
  $region1: #{forward.1} parent=0
    #allocation2 [shape = 'u8[49152]{0}', space=vmem, size = 0xc000, scoped, tag = 'input window, operand 0, single buffered']
    #allocation3 [shape = 's32[1]{0}', space=sflag, size = 0x4, scoped, tag = 'scoped memory for forward.1']
    #allocation4 [shape = 's32[1]{0}', space=sflag, size = 0x4, scoped, tag = 'scoped memory for forward.1']
    #allocation5 [shape = 'u8[49152]{0}', space=vmem, size = 0xc000, scoped, tag = 'input window, operand 1, single buffered']
    #allocation6 [shape = 's32[1]{0}', space=sflag, size = 0x4, scoped, tag = 'scoped memory for forward.1']
    #allocation7 [shape = 'u8[12288]{0}', space=vmem, size = 0x3000, scoped, tag = 'input window, operand 2, single buffered']
    #allocation8 [shape = 'u8[512]{0}', space=vmem, size = 0x400, scoped, tag = 'output window, operand 0, single buffered']
    %8 = vsyncpa [#allocation3], 0
    %9 = vsyncpa [#allocation6], 0
    %10 = vsyncpa [#allocation4], 0
    // Predicated region
    $region2: #{forward.1} parent=1 // pred_check
      _
    $region3: #{forward.1} parent=1 // pred_check_branch
      %12 = sbr.rel (0) target = $region5
    $region4: #{forward.1} parent=1 // pred_region
      %s14 = ssub.s32 1536, 1536
      %15 = vsyncadd [#allocation3], %s14
      %s16 = sshll.u32 [#allocation2], 4
      %s17 = int_to_ptr.vmem [resolvable:$true] %s16
      %22 = dma.hbm_to_vmem [thread:$0]  %s0, 1536, %s17, [#allocation3], 128, 128, 8
    $region5: #{forward.1} parent=1 // pred_fallthru
      _
    // Predicated region
    $region6: #{forward.1} parent=1 // pred_check
      _
    $region7: #{forward.1} parent=1 // pred_check_branch
      %24 = sbr.rel (0) target = $region9
    $region8: #{forward.1} parent=1 // pred_region
      %s26 = ssub.s32 1536, 1536
      %27 = vsyncadd [#allocation6], %s26
      %s28 = sshll.u32 [#allocation5], 4
      %s29 = int_to_ptr.vmem [resolvable:$true] %s28
      %34 = dma.hbm_to_vmem [thread:$0]  %s1, 1536, %s29, [#allocation6], 128, 128, 8
    $region9: #{forward.1} parent=1 // pred_fallthru
      _
    // Predicated region
    $region10: #{forward.1} parent=1 // pred_check
      _
    $region11: #{forward.1} parent=1 // pred_check_branch
      %36 = sbr.rel (0) target = $region13
    $region12: #{forward.1} parent=1 // pred_region
      %s38 = ssub.s32 384, 384
      %39 = vsyncadd [#allocation6], %s38
      %s40 = sshll.u32 [#allocation7], 4
      %s41 = int_to_ptr.vmem [resolvable:$true] %s40
      %46 = dma.hbm_to_vmem [thread:$0]  %s2, 384, %s41, [#allocation6], 128, 128, 8
    $region13: #{forward.1} parent=1 // pred_fallthru
      _
    // Predicated region
    $region14: #{forward.1} parent=1 // pred_check
      _
    $region15: #{forward.1} parent=1 // pred_check_branch
      %48 = sbr.rel (0) target = $region17
    $region16: #{forward.1} parent=1 // pred_region
      %49 = dma.done [#allocation3], 1536
    $region17: #{forward.1} parent=1 // pred_fallthru
      _
    // Predicated region
    $region18: #{forward.1} parent=1 // pred_check
      _
    $region19: #{forward.1} parent=1 // pred_check_branch
      %51 = sbr.rel (0) target = $region21
    $region20: #{forward.1} parent=1 // pred_region
      %52 = dma.done [#allocation6], 1536
    $region21: #{forward.1} parent=1 // pred_fallthru
      _
    // Predicated region
    $region22: #{forward.1} parent=1 // pred_check
      _
    $region23: #{forward.1} parent=1 // pred_check_branch
      %54 = sbr.rel (0) target = $region25
    $region24: #{forward.1} parent=1 // pred_region
      %55 = dma.done [#allocation6], 384
    $region25: #{forward.1} parent=1 // pred_fallthru
      _
    %v56 = vld [vmem:[#allocation2] sm:$0xff]
    %v57 = vld [vmem:[#allocation2 + $0x8] sm:$0xff]
    %v58 = vld [vmem:[#allocation2 + $0x10] sm:$0xff]
    %v59 = vld [vmem:[#allocation2 + $0x18] sm:$0xff]
    %v60 = vld [vmem:[#allocation2 + $0x20] sm:$0xff]
    %v61 = vld [vmem:[#allocation2 + $0x28] sm:$0xff]
    %v62 = vld [vmem:[#allocation2 + $0x30] sm:$0xff]
    %v63 = vld [vmem:[#allocation2 + $0x38] sm:$0xff]
    %v64 = vld [vmem:[#allocation2 + $0x40] sm:$0xff]
    %v65 = vld [vmem:[#allocation2 + $0x48] sm:$0xff]
    %v66 = vld [vmem:[#allocation2 + $0x50] sm:$0xff]
    %v67 = vld [vmem:[#allocation2 + $0x58] sm:$0xff]
    %v68 = vld [vmem:[#allocation5] sm:$0xff]
    %v69 = vld [vmem:[#allocation5 + $0x8] sm:$0xff]
    %v70 = vld [vmem:[#allocation5 + $0x10] sm:$0xff]
    %v71 = vld [vmem:[#allocation5 + $0x18] sm:$0xff]
    %v72 = vld [vmem:[#allocation5 + $0x20] sm:$0xff]
    %v73 = vld [vmem:[#allocation5 + $0x28] sm:$0xff]
    %v74 = vld [vmem:[#allocation5 + $0x30] sm:$0xff]
    %v75 = vld [vmem:[#allocation5 + $0x38] sm:$0xff]
    %v76 = vld [vmem:[#allocation5 + $0x40] sm:$0xff]
    %v77 = vld [vmem:[#allocation5 + $0x48] sm:$0xff]
    %v78 = vld [vmem:[#allocation5 + $0x50] sm:$0xff]
    %v79 = vld [vmem:[#allocation5 + $0x58] sm:$0xff]
    %v80 = vld [vmem:[#allocation7] sm:$0xff]
    %v81 = vld [vmem:[#allocation7 + $0x8] sm:$0xff]
    %v82 = vld [vmem:[#allocation7 + $0x10] sm:$0x3f]
    %v83 = vmul.f32 %v56, %v56
    %v84 = vmul.f32 %v57, %v57
    %v85 = vmul.f32 %v58, %v58
    %v86 = vmul.f32 %v59, %v59
    %v87 = vmul.f32 %v60, %v60
    %v88 = vmul.f32 %v61, %v61
    %v89 = vmul.f32 %v62, %v62
    %v90 = vmul.f32 %v63, %v63
    %v91 = vmul.f32 %v64, %v64
    %v92 = vmul.f32 %v65, %v65
    %v93 = vmul.f32 %v66, %v66
    %v94 = vmul.f32 %v67, %v67
    %v95 = vmul.f32 %v68, %v68
    %v96 = vmul.f32 %v69, %v69
    %v97 = vmul.f32 %v70, %v70
    %v98 = vmul.f32 %v71, %v71
    %v99 = vmul.f32 %v72, %v72
    %v100 = vmul.f32 %v73, %v73
    %v101 = vmul.f32 %v74, %v74
    %v102 = vmul.f32 %v75, %v75
    %v103 = vmul.f32 %v76, %v76
    %v104 = vmul.f32 %v77, %v77
    %v105 = vmul.f32 %v78, %v78
    %v106 = vmul.f32 %v79, %v79
    %v107 = vmul.f32 %v56, %v68
    %v108 = vmul.f32 %v57, %v69
    %v109 = vmul.f32 %v58, %v70
    %v110 = vmul.f32 %v59, %v71
    %v111 = vmul.f32 %v60, %v72
    %v112 = vmul.f32 %v61, %v73
    %v113 = vmul.f32 %v62, %v74
    %v114 = vmul.f32 %v63, %v75
    %v115 = vmul.f32 %v64, %v76
    %v116 = vmul.f32 %v65, %v77
    %v117 = vmul.f32 %v66, %v78
    %v118 = vmul.f32 %v67, %v79
    %vm119 = vcmask 130048
    %v121 = vsel %vm119, %v56, 0
    %v124 = vsel %vm119, %v57, 0
    %v127 = vsel %vm119, %v58, 0
    %v130 = vsel %vm119, %v59, 0
    %v133 = vsel %vm119, %v60, 0
    %v136 = vsel %vm119, %v61, 0
    %v139 = vsel %vm119, %v62, 0
    %v142 = vsel %vm119, %v63, 0
    %v145 = vsel %vm119, %v64, 0
    %v148 = vsel %vm119, %v65, 0
    %v151 = vsel %vm119, %v66, 0
    %v154 = vsel %vm119, %v67, 0
    %v157 = vsel %vm119, %v68, 0
    %v160 = vsel %vm119, %v69, 0
    %v163 = vsel %vm119, %v70, 0
    %v166 = vsel %vm119, %v71, 0
    %v169 = vsel %vm119, %v72, 0
    %v172 = vsel %vm119, %v73, 0
    %v175 = vsel %vm119, %v74, 0
    %v178 = vsel %vm119, %v75, 0
    %v181 = vsel %vm119, %v76, 0
    %v184 = vsel %vm119, %v77, 0
    %v187 = vsel %vm119, %v78, 0
    %v190 = vsel %vm119, %v79, 0
    %v193 = vsel %vm119, %v83, 0
    %v196 = vsel %vm119, %v84, 0
    %v199 = vsel %vm119, %v85, 0
    %v202 = vsel %vm119, %v86, 0
    %v205 = vsel %vm119, %v87, 0
    %v208 = vsel %vm119, %v88, 0
    %v211 = vsel %vm119, %v89, 0
    %v214 = vsel %vm119, %v90, 0
    %v217 = vsel %vm119, %v91, 0
    %v220 = vsel %vm119, %v92, 0
    %v223 = vsel %vm119, %v93, 0
    %v226 = vsel %vm119, %v94, 0
    %v229 = vsel %vm119, %v95, 0
    %v232 = vsel %vm119, %v96, 0
    %v235 = vsel %vm119, %v97, 0
    %v238 = vsel %vm119, %v98, 0
    %v241 = vsel %vm119, %v99, 0
    %v244 = vsel %vm119, %v100, 0
    %v247 = vsel %vm119, %v101, 0
    %v250 = vsel %vm119, %v102, 0
    %v253 = vsel %vm119, %v103, 0
    %v256 = vsel %vm119, %v104, 0
    %v259 = vsel %vm119, %v105, 0
    %v262 = vsel %vm119, %v106, 0
    %v265 = vsel %vm119, %v107, 0
    %v268 = vsel %vm119, %v108, 0
    %v271 = vsel %vm119, %v109, 0
    %v274 = vsel %vm119, %v110, 0
    %v277 = vsel %vm119, %v111, 0
    %v280 = vsel %vm119, %v112, 0
    %v283 = vsel %vm119, %v113, 0
    %v286 = vsel %vm119, %v114, 0
    %v289 = vsel %vm119, %v115, 0
    %v292 = vsel %vm119, %v116, 0
    %v295 = vsel %vm119, %v117, 0
    %v298 = vsel %vm119, %v118, 0
    %300 = vmatprep.subr.mxu0 0.0
    %301 = vmatpush1.msra.mxu0 %v80
    %302 = vmatprep.subr.mxu0 0.0
    %303 = vmatpush1.msra.mxu0 %v81
    %304 = vmatprep.subr.mxu0 0.0
    %305 = vmatpush1.msra.mxu0 0.0
    %306 = vmatprep.subr.mxu0 0.0
    %307 = vmatpush1.msra.mxu0 0.0
    %308 = vmatprep.subr.mxu0 0.0
    %309 = vmatpush1.msra.mxu0 0.0
    %310 = vmatprep.subr.mxu0 0.0
    %311 = vmatpush1.msra.mxu0 0.0
    %312 = vmatprep.subr.mxu0 0.0
    %313 = vmatpush1.msra.mxu0 0.0
    %314 = vmatprep.subr.mxu0 0.0
    %315 = vmatpush1.msra.mxu0 0.0
    %316 = vmatprep.subr.mxu0 0.0
    %317 = vmatpush1.msra.mxu0 0.0
    %318 = vmatprep.subr.mxu0 0.0
    %319 = vmatpush1.msra.mxu0 0.0
    %320 = vmatprep.subr.mxu0 0.0
    %321 = vmatpush1.msra.mxu0 0.0
    %322 = vmatprep.subr.mxu0 0.0
    %323 = vmatpush1.msra.mxu0 0.0
    %324 = vmatprep.subr.mxu0 0.0
    %325 = vmatpush1.msra.mxu0 0.0
    %326 = vmatprep.subr.mxu0 0.0
    %327 = vmatpush1.msra.mxu0 0.0
    %328 = vmatprep.subr.mxu0 0.0
    %329 = vmatpush1.msra.mxu0 0.0
    %330 = vmatprep.subr.mxu0 0.0
    %331 = vmatpush1.msra.mxu0 0.0
    %332 = vmatprep.subr.mxu0 0.0
    %333 = vmatpush1.msra.mxu0 0.0
    %334 = vmatprep.subr.mxu0 0.0
    %335 = vmatpush1.msra.mxu0 0.0
    %336 = vmatprep.subr.mxu0 0.0
    %337 = vmatpush1.msra.mxu0 0.0
    %338 = vmatprep.subr.mxu0 0.0
    %339 = vmatpush1.msra.mxu0 0.0
    %340 = vmatprep.subr.mxu0 0.0
    %341 = vmatpush1.msra.mxu0 0.0
    %342 = vmatprep.subr.mxu0 0.0
    %343 = vmatpush1.msra.mxu0 0.0
    %344 = vmatprep.subr.mxu0 0.0
    %345 = vmatpush1.msra.mxu0 0.0
    %346 = vmatprep.subr.mxu0 0.0
    %347 = vmatpush1.msra.mxu0 0.0
    %348 = vmatprep.subr.mxu0 0.0
    %349 = vmatpush1.msra.mxu0 0.0
    %350 = vmatprep.subr.mxu0 0.0
    %351 = vmatpush1.msra.mxu0 0.0
    %352 = vmatprep.subr.mxu0 0.0
    %353 = vmatpush1.msra.mxu0 0.0
    %354 = vmatprep.subr.mxu0 0.0
    %355 = vmatpush1.msra.mxu0 0.0
    %356 = vmatprep.subr.mxu0 0.0
    %357 = vmatpush1.msra.mxu0 0.0
    %358 = vmatprep.subr.mxu0 0.0
    %359 = vmatpush1.msra.mxu0 0.0
    %360 = vmatprep.subr.mxu0 0.0
    %361 = vmatpush1.msra.mxu0 0.0
    %362 = vmatprep.subr.mxu0 0.0
    %363 = vmatpush1.msra.mxu0 0.0
    %364 = vmatprep.mubr.f32.mxu0 0.0
    %365 = vmatmul.mubr.f32.gmra.mrb[0].mxu0 %v121
    %v366 = vpop.f32.mrb[0].mxu0
    %v367 = vadd.f32 0.0, %v366
    %v368 = vpop.f32.mrb[0].mxu0
    %369 = vmatprep.mubr.f32.mxu0 0.0
    %370 = vmatmul.mubr.f32.gmra.mrb[0].mxu0 %v124
    %v371 = vpop.f32.mrb[0].mxu0
    %v372 = vadd.f32 0.0, %v371
    %v373 = vpop.f32.mrb[0].mxu0
    %374 = vmatprep.mubr.f32.mxu0 0.0
    %375 = vmatmul.mubr.f32.gmra.mrb[0].mxu0 %v127
    %v376 = vpop.f32.mrb[0].mxu0
    %v377 = vadd.f32 0.0, %v376
    %v378 = vpop.f32.mrb[0].mxu0
    %379 = vmatprep.mubr.f32.mxu0 0.0
    %380 = vmatmul.mubr.f32.gmra.mrb[0].mxu0 %v130
    %v381 = vpop.f32.mrb[0].mxu0
    %v382 = vadd.f32 0.0, %v381
    %v383 = vpop.f32.mrb[0].mxu0
    %384 = vmatprep.mubr.f32.mxu0 0.0
    %385 = vmatmul.mubr.f32.gmra.mrb[0].mxu0 %v133
    %v386 = vpop.f32.mrb[0].mxu0
    %v387 = vadd.f32 0.0, %v386
    %v388 = vpop.f32.mrb[0].mxu0
    %389 = vmatprep.mubr.f32.mxu0 0.0
    %390 = vmatmul.mubr.f32.gmra.mrb[0].mxu0 %v136
    %v391 = vpop.f32.mrb[0].mxu0
    %v392 = vadd.f32 0.0, %v391
    %v393 = vpop.f32.mrb[0].mxu0
    %394 = vmatprep.mubr.f32.mxu0 0.0
    %395 = vmatmul.mubr.f32.gmra.mrb[0].mxu0 %v139
    %v396 = vpop.f32.mrb[0].mxu0
    %v397 = vadd.f32 0.0, %v396
    %v398 = vpop.f32.mrb[0].mxu0
    %399 = vmatprep.mubr.f32.mxu0 0.0
    %400 = vmatmul.mubr.f32.gmra.mrb[0].mxu0 %v142
    %v401 = vpop.f32.mrb[0].mxu0
    %v402 = vadd.f32 0.0, %v401
    %v403 = vpop.f32.mrb[0].mxu0
    %404 = vmatprep.mubr.f32.mxu0 0.0
    %405 = vmatmul.mubr.f32.gmra.mrb[0].mxu0 %v145
    %v406 = vpop.f32.mrb[0].mxu0
    %v407 = vadd.f32 0.0, %v406
    %v408 = vpop.f32.mrb[0].mxu0
    %409 = vmatprep.mubr.f32.mxu0 0.0
    %410 = vmatmul.mubr.f32.gmra.mrb[0].mxu0 %v148
    %v411 = vpop.f32.mrb[0].mxu0
    %v412 = vadd.f32 0.0, %v411
    %v413 = vpop.f32.mrb[0].mxu0
    %414 = vmatprep.mubr.f32.mxu0 0.0
    %415 = vmatmul.mubr.f32.gmra.mrb[0].mxu0 %v151
    %v416 = vpop.f32.mrb[0].mxu0
    %v417 = vadd.f32 0.0, %v416
    %v418 = vpop.f32.mrb[0].mxu0
    %419 = vmatprep.mubr.f32.mxu0 0.0
    %420 = vmatmul.mubr.f32.gmra.mrb[0].mxu0 %v154
    %v421 = vpop.f32.mrb[0].mxu0
    %v422 = vadd.f32 0.0, %v421
    %v423 = vpop.f32.mrb[0].mxu0
    %424 = vmatprep.mubr.f32.mxu0 0.0
    %425 = vmatmul.mubr.f32.gmra.mrb[0].mxu0 %v157
    %v426 = vpop.f32.mrb[0].mxu0
    %v427 = vadd.f32 0.0, %v426
    %v428 = vpop.f32.mrb[0].mxu0
    %429 = vmatprep.mubr.f32.mxu0 0.0
    %430 = vmatmul.mubr.f32.gmra.mrb[0].mxu0 %v160
    %v431 = vpop.f32.mrb[0].mxu0
    %v432 = vadd.f32 0.0, %v431
    %v433 = vpop.f32.mrb[0].mxu0
    %434 = vmatprep.mubr.f32.mxu0 0.0
    %435 = vmatmul.mubr.f32.gmra.mrb[0].mxu0 %v163
    %v436 = vpop.f32.mrb[0].mxu0
    %v437 = vadd.f32 0.0, %v436
    %v438 = vpop.f32.mrb[0].mxu0
    %439 = vmatprep.mubr.f32.mxu0 0.0
    %440 = vmatmul.mubr.f32.gmra.mrb[0].mxu0 %v166
    %v441 = vpop.f32.mrb[0].mxu0
    %v442 = vadd.f32 0.0, %v441
    %v443 = vpop.f32.mrb[0].mxu0
    %444 = vmatprep.mubr.f32.mxu0 0.0
    %445 = vmatmul.mubr.f32.gmra.mrb[0].mxu0 %v169
    %v446 = vpop.f32.mrb[0].mxu0
    %v447 = vadd.f32 0.0, %v446
    %v448 = vpop.f32.mrb[0].mxu0
    %449 = vmatprep.mubr.f32.mxu0 0.0
    %450 = vmatmul.mubr.f32.gmra.mrb[0].mxu0 %v172
    %v451 = vpop.f32.mrb[0].mxu0
    %v452 = vadd.f32 0.0, %v451
    %v453 = vpop.f32.mrb[0].mxu0
    %454 = vmatprep.mubr.f32.mxu0 0.0
    %455 = vmatmul.mubr.f32.gmra.mrb[0].mxu0 %v175
    %v456 = vpop.f32.mrb[0].mxu0
    %v457 = vadd.f32 0.0, %v456
    %v458 = vpop.f32.mrb[0].mxu0
    %459 = vmatprep.mubr.f32.mxu0 0.0
    %460 = vmatmul.mubr.f32.gmra.mrb[0].mxu0 %v178
    %v461 = vpop.f32.mrb[0].mxu0
    %v462 = vadd.f32 0.0, %v461
    %v463 = vpop.f32.mrb[0].mxu0
    %464 = vmatprep.mubr.f32.mxu0 0.0
    %465 = vmatmul.mubr.f32.gmra.mrb[0].mxu0 %v181
    %v466 = vpop.f32.mrb[0].mxu0
    %v467 = vadd.f32 0.0, %v466
    %v468 = vpop.f32.mrb[0].mxu0
    %469 = vmatprep.mubr.f32.mxu0 0.0
    %470 = vmatmul.mubr.f32.gmra.mrb[0].mxu0 %v184
    %v471 = vpop.f32.mrb[0].mxu0
    %v472 = vadd.f32 0.0, %v471
    %v473 = vpop.f32.mrb[0].mxu0
    %474 = vmatprep.mubr.f32.mxu0 0.0
    %475 = vmatmul.mubr.f32.gmra.mrb[0].mxu0 %v187
    %v476 = vpop.f32.mrb[0].mxu0
    %v477 = vadd.f32 0.0, %v476
    %v478 = vpop.f32.mrb[0].mxu0
    %479 = vmatprep.mubr.f32.mxu0 0.0
    %480 = vmatmul.mubr.f32.gmra.mrb[0].mxu0 %v190
    %v481 = vpop.f32.mrb[0].mxu0
    %v482 = vadd.f32 0.0, %v481
    %v483 = vpop.f32.mrb[0].mxu0
    %484 = vmatprep.mubr.f32.mxu0 0.0
    %485 = vmatmul.mubr.f32.gmra.mrb[0].mxu0 %v193
    %v486 = vpop.f32.mrb[0].mxu0
    %v487 = vadd.f32 0.0, %v486
    %v488 = vpop.f32.mrb[0].mxu0
    %489 = vmatprep.mubr.f32.mxu0 0.0
    %490 = vmatmul.mubr.f32.gmra.mrb[0].mxu0 %v196
    %v491 = vpop.f32.mrb[0].mxu0
    %v492 = vadd.f32 0.0, %v491
    %v493 = vpop.f32.mrb[0].mxu0
    %494 = vmatprep.mubr.f32.mxu0 0.0
    %495 = vmatmul.mubr.f32.gmra.mrb[0].mxu0 %v199
    %v496 = vpop.f32.mrb[0].mxu0
    %v497 = vadd.f32 0.0, %v496
    %v498 = vpop.f32.mrb[0].mxu0
    %499 = vmatprep.mubr.f32.mxu0 0.0
    %500 = vmatmul.mubr.f32.gmra.mrb[0].mxu0 %v202
    %v501 = vpop.f32.mrb[0].mxu0
    %v502 = vadd.f32 0.0, %v501
    %v503 = vpop.f32.mrb[0].mxu0
    %504 = vmatprep.mubr.f32.mxu0 0.0
    %505 = vmatmul.mubr.f32.gmra.mrb[0].mxu0 %v205
    %v506 = vpop.f32.mrb[0].mxu0
    %v507 = vadd.f32 0.0, %v506
    %v508 = vpop.f32.mrb[0].mxu0
    %509 = vmatprep.mubr.f32.mxu0 0.0
    %510 = vmatmul.mubr.f32.gmra.mrb[0].mxu0 %v208
    %v511 = vpop.f32.mrb[0].mxu0
    %v512 = vadd.f32 0.0, %v511
    %v513 = vpop.f32.mrb[0].mxu0
    %514 = vmatprep.mubr.f32.mxu0 0.0
    %515 = vmatmul.mubr.f32.gmra.mrb[0].mxu0 %v211
    %v516 = vpop.f32.mrb[0].mxu0
    %v517 = vadd.f32 0.0, %v516
    %v518 = vpop.f32.mrb[0].mxu0
    %519 = vmatprep.mubr.f32.mxu0 0.0
    %520 = vmatmul.mubr.f32.gmra.mrb[0].mxu0 %v214
    %v521 = vpop.f32.mrb[0].mxu0
    %v522 = vadd.f32 0.0, %v521
    %v523 = vpop.f32.mrb[0].mxu0
    %524 = vmatprep.mubr.f32.mxu0 0.0
    %525 = vmatmul.mubr.f32.gmra.mrb[0].mxu0 %v217
    %v526 = vpop.f32.mrb[0].mxu0
    %v527 = vadd.f32 0.0, %v526
    %v528 = vpop.f32.mrb[0].mxu0
    %529 = vmatprep.mubr.f32.mxu0 0.0
    %530 = vmatmul.mubr.f32.gmra.mrb[0].mxu0 %v220
    %v531 = vpop.f32.mrb[0].mxu0
    %v532 = vadd.f32 0.0, %v531
    %v533 = vpop.f32.mrb[0].mxu0
    %534 = vmatprep.mubr.f32.mxu0 0.0
    %535 = vmatmul.mubr.f32.gmra.mrb[0].mxu0 %v223
    %v536 = vpop.f32.mrb[0].mxu0
    %v537 = vadd.f32 0.0, %v536
    %v538 = vpop.f32.mrb[0].mxu0
    %539 = vmatprep.mubr.f32.mxu0 0.0
    %540 = vmatmul.mubr.f32.gmra.mrb[0].mxu0 %v226
    %v541 = vpop.f32.mrb[0].mxu0
    %v542 = vadd.f32 0.0, %v541
    %v543 = vpop.f32.mrb[0].mxu0
    %544 = vmatprep.mubr.f32.mxu0 0.0
    %545 = vmatmul.mubr.f32.gmra.mrb[0].mxu0 %v229
    %v546 = vpop.f32.mrb[0].mxu0
    %v547 = vadd.f32 0.0, %v546
    %v548 = vpop.f32.mrb[0].mxu0
    %549 = vmatprep.mubr.f32.mxu0 0.0
    %550 = vmatmul.mubr.f32.gmra.mrb[0].mxu0 %v232
    %v551 = vpop.f32.mrb[0].mxu0
    %v552 = vadd.f32 0.0, %v551
    %v553 = vpop.f32.mrb[0].mxu0
    %554 = vmatprep.mubr.f32.mxu0 0.0
    %555 = vmatmul.mubr.f32.gmra.mrb[0].mxu0 %v235
    %v556 = vpop.f32.mrb[0].mxu0
    %v557 = vadd.f32 0.0, %v556
    %v558 = vpop.f32.mrb[0].mxu0
    %559 = vmatprep.mubr.f32.mxu0 0.0
    %560 = vmatmul.mubr.f32.gmra.mrb[0].mxu0 %v238
    %v561 = vpop.f32.mrb[0].mxu0
    %v562 = vadd.f32 0.0, %v561
    %v563 = vpop.f32.mrb[0].mxu0
    %564 = vmatprep.mubr.f32.mxu0 0.0
    %565 = vmatmul.mubr.f32.gmra.mrb[0].mxu0 %v241
    %v566 = vpop.f32.mrb[0].mxu0
    %v567 = vadd.f32 0.0, %v566
    %v568 = vpop.f32.mrb[0].mxu0
    %569 = vmatprep.mubr.f32.mxu0 0.0
    %570 = vmatmul.mubr.f32.gmra.mrb[0].mxu0 %v244
    %v571 = vpop.f32.mrb[0].mxu0
    %v572 = vadd.f32 0.0, %v571
    %v573 = vpop.f32.mrb[0].mxu0
    %574 = vmatprep.mubr.f32.mxu0 0.0
    %575 = vmatmul.mubr.f32.gmra.mrb[0].mxu0 %v247
    %v576 = vpop.f32.mrb[0].mxu0
    %v577 = vadd.f32 0.0, %v576
    %v578 = vpop.f32.mrb[0].mxu0
    %579 = vmatprep.mubr.f32.mxu0 0.0
    %580 = vmatmul.mubr.f32.gmra.mrb[0].mxu0 %v250
    %v581 = vpop.f32.mrb[0].mxu0
    %v582 = vadd.f32 0.0, %v581
    %v583 = vpop.f32.mrb[0].mxu0
    %584 = vmatprep.mubr.f32.mxu0 0.0
    %585 = vmatmul.mubr.f32.gmra.mrb[0].mxu0 %v253
    %v586 = vpop.f32.mrb[0].mxu0
    %v587 = vadd.f32 0.0, %v586
    %v588 = vpop.f32.mrb[0].mxu0
    %589 = vmatprep.mubr.f32.mxu0 0.0
    %590 = vmatmul.mubr.f32.gmra.mrb[0].mxu0 %v256
    %v591 = vpop.f32.mrb[0].mxu0
    %v592 = vadd.f32 0.0, %v591
    %v593 = vpop.f32.mrb[0].mxu0
    %594 = vmatprep.mubr.f32.mxu0 0.0
    %595 = vmatmul.mubr.f32.gmra.mrb[0].mxu0 %v259
    %v596 = vpop.f32.mrb[0].mxu0
    %v597 = vadd.f32 0.0, %v596
    %v598 = vpop.f32.mrb[0].mxu0
    %599 = vmatprep.mubr.f32.mxu0 0.0
    %600 = vmatmul.mubr.f32.gmra.mrb[0].mxu0 %v262
    %v601 = vpop.f32.mrb[0].mxu0
    %v602 = vadd.f32 0.0, %v601
    %v603 = vpop.f32.mrb[0].mxu0
    %604 = vmatprep.mubr.f32.mxu0 0.0
    %605 = vmatmul.mubr.f32.gmra.mrb[0].mxu0 %v265
    %v606 = vpop.f32.mrb[0].mxu0
    %v607 = vadd.f32 0.0, %v606
    %v608 = vpop.f32.mrb[0].mxu0
    %609 = vmatprep.mubr.f32.mxu0 0.0
    %610 = vmatmul.mubr.f32.gmra.mrb[0].mxu0 %v268
    %v611 = vpop.f32.mrb[0].mxu0
    %v612 = vadd.f32 0.0, %v611
    %v613 = vpop.f32.mrb[0].mxu0
    %614 = vmatprep.mubr.f32.mxu0 0.0
    %615 = vmatmul.mubr.f32.gmra.mrb[0].mxu0 %v271
    %v616 = vpop.f32.mrb[0].mxu0
    %v617 = vadd.f32 0.0, %v616
    %v618 = vpop.f32.mrb[0].mxu0
    %619 = vmatprep.mubr.f32.mxu0 0.0
    %620 = vmatmul.mubr.f32.gmra.mrb[0].mxu0 %v274
    %v621 = vpop.f32.mrb[0].mxu0
    %v622 = vadd.f32 0.0, %v621
    %v623 = vpop.f32.mrb[0].mxu0
    %624 = vmatprep.mubr.f32.mxu0 0.0
    %625 = vmatmul.mubr.f32.gmra.mrb[0].mxu0 %v277
    %v626 = vpop.f32.mrb[0].mxu0
    %v627 = vadd.f32 0.0, %v626
    %v628 = vpop.f32.mrb[0].mxu0
    %629 = vmatprep.mubr.f32.mxu0 0.0
    %630 = vmatmul.mubr.f32.gmra.mrb[0].mxu0 %v280
    %v631 = vpop.f32.mrb[0].mxu0
    %v632 = vadd.f32 0.0, %v631
    %v633 = vpop.f32.mrb[0].mxu0
    %634 = vmatprep.mubr.f32.mxu0 0.0
    %635 = vmatmul.mubr.f32.gmra.mrb[0].mxu0 %v283
    %v636 = vpop.f32.mrb[0].mxu0
    %v637 = vadd.f32 0.0, %v636
    %v638 = vpop.f32.mrb[0].mxu0
    %639 = vmatprep.mubr.f32.mxu0 0.0
    %640 = vmatmul.mubr.f32.gmra.mrb[0].mxu0 %v286
    %v641 = vpop.f32.mrb[0].mxu0
    %v642 = vadd.f32 0.0, %v641
    %v643 = vpop.f32.mrb[0].mxu0
    %644 = vmatprep.mubr.f32.mxu0 0.0
    %645 = vmatmul.mubr.f32.gmra.mrb[0].mxu0 %v289
    %v646 = vpop.f32.mrb[0].mxu0
    %v647 = vadd.f32 0.0, %v646
    %v648 = vpop.f32.mrb[0].mxu0
    %649 = vmatprep.mubr.f32.mxu0 0.0
    %650 = vmatmul.mubr.f32.gmra.mrb[0].mxu0 %v292
    %v651 = vpop.f32.mrb[0].mxu0
    %v652 = vadd.f32 0.0, %v651
    %v653 = vpop.f32.mrb[0].mxu0
    %654 = vmatprep.mubr.f32.mxu0 0.0
    %655 = vmatmul.mubr.f32.gmra.mrb[0].mxu0 %v295
    %v656 = vpop.f32.mrb[0].mxu0
    %v657 = vadd.f32 0.0, %v656
    %v658 = vpop.f32.mrb[0].mxu0
    %659 = vmatprep.mubr.f32.mxu0 0.0
    %660 = vmatmul.mubr.f32.gmra.mrb[0].mxu0 %v298
    %v661 = vpop.f32.mrb[0].mxu0
    %v662 = vadd.f32 0.0, %v661
    %v663 = vpop.f32.mrb[0].mxu0
    %664 = vdwg.mxu0
    %v666 = vsel %vm119, %v82, 0
    %668 = vmatprep.subr.mxu0 0.0
    %669 = vmatpush1.msra.mxu0 %v367
    %670 = vmatprep.subr.mxu0 0.0
    %671 = vmatpush1.msra.mxu0 %v372
    %672 = vmatprep.subr.mxu0 0.0
    %673 = vmatpush1.msra.mxu0 0.0
    %674 = vmatprep.subr.mxu0 0.0
    %675 = vmatpush1.msra.mxu0 0.0
    %676 = vmatprep.subr.mxu0 0.0
    %677 = vmatpush1.msra.mxu0 0.0
    %678 = vmatprep.subr.mxu0 0.0
    %679 = vmatpush1.msra.mxu0 0.0
    %680 = vmatprep.subr.mxu0 0.0
    %681 = vmatpush1.msra.mxu0 0.0
    %682 = vmatprep.subr.mxu0 0.0
    %683 = vmatpush1.msra.mxu0 0.0
    %684 = vmatprep.subr.mxu0 0.0
    %685 = vmatpush1.msra.mxu0 0.0
    %686 = vmatprep.subr.mxu0 0.0
    %687 = vmatpush1.msra.mxu0 0.0
    %688 = vmatprep.subr.mxu0 0.0
    %689 = vmatpush1.msra.mxu0 0.0
    %690 = vmatprep.subr.mxu0 0.0
    %691 = vmatpush1.msra.mxu0 0.0
    %692 = vmatprep.subr.mxu0 0.0
    %693 = vmatpush1.msra.mxu0 0.0
    %694 = vmatprep.subr.mxu0 0.0
    %695 = vmatpush1.msra.mxu0 0.0
    %696 = vmatprep.subr.mxu0 0.0
    %697 = vmatpush1.msra.mxu0 0.0
    %698 = vmatprep.subr.mxu0 0.0
    %699 = vmatpush1.msra.mxu0 0.0
    %700 = vmatprep.subr.mxu0 0.0
    %701 = vmatpush1.msra.mxu0 0.0
    %702 = vmatprep.subr.mxu0 0.0
    %703 = vmatpush1.msra.mxu0 0.0
    %704 = vmatprep.subr.mxu0 0.0
    %705 = vmatpush1.msra.mxu0 0.0
    %706 = vmatprep.subr.mxu0 0.0
    %707 = vmatpush1.msra.mxu0 0.0
    %708 = vmatprep.subr.mxu0 0.0
    %709 = vmatpush1.msra.mxu0 0.0
    %710 = vmatprep.subr.mxu0 0.0
    %711 = vmatpush1.msra.mxu0 0.0
    %712 = vmatprep.subr.mxu0 0.0
    %713 = vmatpush1.msra.mxu0 0.0
    %714 = vmatprep.subr.mxu0 0.0
    %715 = vmatpush1.msra.mxu0 0.0
    %716 = vmatprep.subr.mxu0 0.0
    %717 = vmatpush1.msra.mxu0 0.0
    %718 = vmatprep.subr.mxu0 0.0
    %719 = vmatpush1.msra.mxu0 0.0
    %720 = vmatprep.subr.mxu0 0.0
    %721 = vmatpush1.msra.mxu0 0.0
    %722 = vmatprep.subr.mxu0 0.0
    %723 = vmatpush1.msra.mxu0 0.0
    %724 = vmatprep.subr.mxu0 0.0
    %725 = vmatpush1.msra.mxu0 0.0
    %726 = vmatprep.subr.mxu0 0.0
    %727 = vmatpush1.msra.mxu0 0.0
    %728 = vmatprep.subr.mxu0 0.0
    %729 = vmatpush1.msra.mxu0 0.0
    %730 = vmatprep.subr.mxu0 0.0
    %731 = vmatpush1.msra.mxu0 0.0
    %732 = vmatprep.mubr.f32.mxu0 0.0
    %733 = vmatmul.mubr.f32.gmra.mrb[0].mxu0 %v666
    %v734 = vpop.f32.mrb[0].mxu0
    %v735 = vadd.f32 0.0, %v734
    %v736 = vpop.f32.mrb[0].mxu0
    %737 = vdwg.mxu0
    %738 = vmatprep.subr.mxu0 0.0
    %739 = vmatpush1.msra.mxu0 %v377
    %740 = vmatprep.subr.mxu0 0.0
    %741 = vmatpush1.msra.mxu0 %v382
    %742 = vmatprep.subr.mxu0 0.0
    %743 = vmatpush1.msra.mxu0 0.0
    %744 = vmatprep.subr.mxu0 0.0
    %745 = vmatpush1.msra.mxu0 0.0
    %746 = vmatprep.subr.mxu0 0.0
    %747 = vmatpush1.msra.mxu0 0.0
    %748 = vmatprep.subr.mxu0 0.0
    %749 = vmatpush1.msra.mxu0 0.0
    %750 = vmatprep.subr.mxu0 0.0
    %751 = vmatpush1.msra.mxu0 0.0
    %752 = vmatprep.subr.mxu0 0.0
    %753 = vmatpush1.msra.mxu0 0.0
    %754 = vmatprep.subr.mxu0 0.0
    %755 = vmatpush1.msra.mxu0 0.0
    %756 = vmatprep.subr.mxu0 0.0
    %757 = vmatpush1.msra.mxu0 0.0
    %758 = vmatprep.subr.mxu0 0.0
    %759 = vmatpush1.msra.mxu0 0.0
    %760 = vmatprep.subr.mxu0 0.0
    %761 = vmatpush1.msra.mxu0 0.0
    %762 = vmatprep.subr.mxu0 0.0
    %763 = vmatpush1.msra.mxu0 0.0
    %764 = vmatprep.subr.mxu0 0.0
    %765 = vmatpush1.msra.mxu0 0.0
    %766 = vmatprep.subr.mxu0 0.0
    %767 = vmatpush1.msra.mxu0 0.0
    %768 = vmatprep.subr.mxu0 0.0
    %769 = vmatpush1.msra.mxu0 0.0
    %770 = vmatprep.subr.mxu0 0.0
    %771 = vmatpush1.msra.mxu0 0.0
    %772 = vmatprep.subr.mxu0 0.0
    %773 = vmatpush1.msra.mxu0 0.0
    %774 = vmatprep.subr.mxu0 0.0
    %775 = vmatpush1.msra.mxu0 0.0
    %776 = vmatprep.subr.mxu0 0.0
    %777 = vmatpush1.msra.mxu0 0.0
    %778 = vmatprep.subr.mxu0 0.0
    %779 = vmatpush1.msra.mxu0 0.0
    %780 = vmatprep.subr.mxu0 0.0
    %781 = vmatpush1.msra.mxu0 0.0
    %782 = vmatprep.subr.mxu0 0.0
    %783 = vmatpush1.msra.mxu0 0.0
    %784 = vmatprep.subr.mxu0 0.0
    %785 = vmatpush1.msra.mxu0 0.0
    %786 = vmatprep.subr.mxu0 0.0
    %787 = vmatpush1.msra.mxu0 0.0
    %788 = vmatprep.subr.mxu0 0.0
    %789 = vmatpush1.msra.mxu0 0.0
    %790 = vmatprep.subr.mxu0 0.0
    %791 = vmatpush1.msra.mxu0 0.0
    %792 = vmatprep.subr.mxu0 0.0
    %793 = vmatpush1.msra.mxu0 0.0
    %794 = vmatprep.subr.mxu0 0.0
    %795 = vmatpush1.msra.mxu0 0.0
    %796 = vmatprep.subr.mxu0 0.0
    %797 = vmatpush1.msra.mxu0 0.0
    %798 = vmatprep.subr.mxu0 0.0
    %799 = vmatpush1.msra.mxu0 0.0
    %800 = vmatprep.subr.mxu0 0.0
    %801 = vmatpush1.msra.mxu0 0.0
    %802 = vmatprep.mubr.f32.mxu0 0.0
    %803 = vmatmul.mubr.f32.gmra.mrb[0].mxu0 %v666
    %v804 = vpop.f32.mrb[0].mxu0
    %v805 = vadd.f32 0.0, %v804
    %v806 = vpop.f32.mrb[0].mxu0
    %807 = vdwg.mxu0
    %808 = vmatprep.subr.mxu0 0.0
    %809 = vmatpush1.msra.mxu0 %v387
    %810 = vmatprep.subr.mxu0 0.0
    %811 = vmatpush1.msra.mxu0 %v392
    %812 = vmatprep.subr.mxu0 0.0
    %813 = vmatpush1.msra.mxu0 0.0
    %814 = vmatprep.subr.mxu0 0.0
    %815 = vmatpush1.msra.mxu0 0.0
    %816 = vmatprep.subr.mxu0 0.0
    %817 = vmatpush1.msra.mxu0 0.0
    %818 = vmatprep.subr.mxu0 0.0
    %819 = vmatpush1.msra.mxu0 0.0
    %820 = vmatprep.subr.mxu0 0.0
    %821 = vmatpush1.msra.mxu0 0.0
    %822 = vmatprep.subr.mxu0 0.0
    %823 = vmatpush1.msra.mxu0 0.0
    %824 = vmatprep.subr.mxu0 0.0
    %825 = vmatpush1.msra.mxu0 0.0
    %826 = vmatprep.subr.mxu0 0.0
    %827 = vmatpush1.msra.mxu0 0.0
    %828 = vmatprep.subr.mxu0 0.0
    %829 = vmatpush1.msra.mxu0 0.0
    %830 = vmatprep.subr.mxu0 0.0
    %831 = vmatpush1.msra.mxu0 0.0
    %832 = vmatprep.subr.mxu0 0.0
    %833 = vmatpush1.msra.mxu0 0.0
    %834 = vmatprep.subr.mxu0 0.0
    %835 = vmatpush1.msra.mxu0 0.0
    %836 = vmatprep.subr.mxu0 0.0
    %837 = vmatpush1.msra.mxu0 0.0
    %838 = vmatprep.subr.mxu0 0.0
    %839 = vmatpush1.msra.mxu0 0.0
    %840 = vmatprep.subr.mxu0 0.0
    %841 = vmatpush1.msra.mxu0 0.0
    %842 = vmatprep.subr.mxu0 0.0
    %843 = vmatpush1.msra.mxu0 0.0
    %844 = vmatprep.subr.mxu0 0.0
    %845 = vmatpush1.msra.mxu0 0.0
    %846 = vmatprep.subr.mxu0 0.0
    %847 = vmatpush1.msra.mxu0 0.0
    %848 = vmatprep.subr.mxu0 0.0
    %849 = vmatpush1.msra.mxu0 0.0
    %850 = vmatprep.subr.mxu0 0.0
    %851 = vmatpush1.msra.mxu0 0.0
    %852 = vmatprep.subr.mxu0 0.0
    %853 = vmatpush1.msra.mxu0 0.0
    %854 = vmatprep.subr.mxu0 0.0
    %855 = vmatpush1.msra.mxu0 0.0
    %856 = vmatprep.subr.mxu0 0.0
    %857 = vmatpush1.msra.mxu0 0.0
    %858 = vmatprep.subr.mxu0 0.0
    %859 = vmatpush1.msra.mxu0 0.0
    %860 = vmatprep.subr.mxu0 0.0
    %861 = vmatpush1.msra.mxu0 0.0
    %862 = vmatprep.subr.mxu0 0.0
    %863 = vmatpush1.msra.mxu0 0.0
    %864 = vmatprep.subr.mxu0 0.0
    %865 = vmatpush1.msra.mxu0 0.0
    %866 = vmatprep.subr.mxu0 0.0
    %867 = vmatpush1.msra.mxu0 0.0
    %868 = vmatprep.subr.mxu0 0.0
    %869 = vmatpush1.msra.mxu0 0.0
    %870 = vmatprep.subr.mxu0 0.0
    %871 = vmatpush1.msra.mxu0 0.0
    %872 = vmatprep.mubr.f32.mxu0 0.0
    %873 = vmatmul.mubr.f32.gmra.mrb[0].mxu0 %v666
    %v874 = vpop.f32.mrb[0].mxu0
    %v875 = vadd.f32 0.0, %v874
    %v876 = vpop.f32.mrb[0].mxu0
    %877 = vdwg.mxu0
    %878 = vmatprep.subr.mxu0 0.0
    %879 = vmatpush1.msra.mxu0 %v397
    %880 = vmatprep.subr.mxu0 0.0
    %881 = vmatpush1.msra.mxu0 %v402
    %882 = vmatprep.subr.mxu0 0.0
    %883 = vmatpush1.msra.mxu0 0.0
    %884 = vmatprep.subr.mxu0 0.0
    %885 = vmatpush1.msra.mxu0 0.0
    %886 = vmatprep.subr.mxu0 0.0
    %887 = vmatpush1.msra.mxu0 0.0
    %888 = vmatprep.subr.mxu0 0.0
    %889 = vmatpush1.msra.mxu0 0.0
    %890 = vmatprep.subr.mxu0 0.0
    %891 = vmatpush1.msra.mxu0 0.0
    %892 = vmatprep.subr.mxu0 0.0
    %893 = vmatpush1.msra.mxu0 0.0
    %894 = vmatprep.subr.mxu0 0.0
    %895 = vmatpush1.msra.mxu0 0.0
    %896 = vmatprep.subr.mxu0 0.0
    %897 = vmatpush1.msra.mxu0 0.0
    %898 = vmatprep.subr.mxu0 0.0
    %899 = vmatpush1.msra.mxu0 0.0
    %900 = vmatprep.subr.mxu0 0.0
    %901 = vmatpush1.msra.mxu0 0.0
    %902 = vmatprep.subr.mxu0 0.0
    %903 = vmatpush1.msra.mxu0 0.0
    %904 = vmatprep.subr.mxu0 0.0
    %905 = vmatpush1.msra.mxu0 0.0
    %906 = vmatprep.subr.mxu0 0.0
    %907 = vmatpush1.msra.mxu0 0.0
    %908 = vmatprep.subr.mxu0 0.0
    %909 = vmatpush1.msra.mxu0 0.0
    %910 = vmatprep.subr.mxu0 0.0
    %911 = vmatpush1.msra.mxu0 0.0
    %912 = vmatprep.subr.mxu0 0.0
    %913 = vmatpush1.msra.mxu0 0.0
    %914 = vmatprep.subr.mxu0 0.0
    %915 = vmatpush1.msra.mxu0 0.0
    %916 = vmatprep.subr.mxu0 0.0
    %917 = vmatpush1.msra.mxu0 0.0
    %918 = vmatprep.subr.mxu0 0.0
    %919 = vmatpush1.msra.mxu0 0.0
    %920 = vmatprep.subr.mxu0 0.0
    %921 = vmatpush1.msra.mxu0 0.0
    %922 = vmatprep.subr.mxu0 0.0
    %923 = vmatpush1.msra.mxu0 0.0
    %924 = vmatprep.subr.mxu0 0.0
    %925 = vmatpush1.msra.mxu0 0.0
    %926 = vmatprep.subr.mxu0 0.0
    %927 = vmatpush1.msra.mxu0 0.0
    %928 = vmatprep.subr.mxu0 0.0
    %929 = vmatpush1.msra.mxu0 0.0
    %930 = vmatprep.subr.mxu0 0.0
    %931 = vmatpush1.msra.mxu0 0.0
    %932 = vmatprep.subr.mxu0 0.0
    %933 = vmatpush1.msra.mxu0 0.0
    %934 = vmatprep.subr.mxu0 0.0
    %935 = vmatpush1.msra.mxu0 0.0
    %936 = vmatprep.subr.mxu0 0.0
    %937 = vmatpush1.msra.mxu0 0.0
    %938 = vmatprep.subr.mxu0 0.0
    %939 = vmatpush1.msra.mxu0 0.0
    %940 = vmatprep.subr.mxu0 0.0
    %941 = vmatpush1.msra.mxu0 0.0
    %942 = vmatprep.mubr.f32.mxu0 0.0
    %943 = vmatmul.mubr.f32.gmra.mrb[0].mxu0 %v666
    %v944 = vpop.f32.mrb[0].mxu0
    %v945 = vadd.f32 0.0, %v944
    %v946 = vpop.f32.mrb[0].mxu0
    %947 = vdwg.mxu0
    %948 = vmatprep.subr.mxu0 0.0
    %949 = vmatpush1.msra.mxu0 %v407
    %950 = vmatprep.subr.mxu0 0.0
    %951 = vmatpush1.msra.mxu0 %v412
    %952 = vmatprep.subr.mxu0 0.0
    %953 = vmatpush1.msra.mxu0 0.0
    %954 = vmatprep.subr.mxu0 0.0
    %955 = vmatpush1.msra.mxu0 0.0
    %956 = vmatprep.subr.mxu0 0.0
    %957 = vmatpush1.msra.mxu0 0.0
    %958 = vmatprep.subr.mxu0 0.0
    %959 = vmatpush1.msra.mxu0 0.0
    %960 = vmatprep.subr.mxu0 0.0
    %961 = vmatpush1.msra.mxu0 0.0
    %962 = vmatprep.subr.mxu0 0.0
    %963 = vmatpush1.msra.mxu0 0.0
    %964 = vmatprep.subr.mxu0 0.0
    %965 = vmatpush1.msra.mxu0 0.0
    %966 = vmatprep.subr.mxu0 0.0
    %967 = vmatpush1.msra.mxu0 0.0
    %968 = vmatprep.subr.mxu0 0.0
    %969 = vmatpush1.msra.mxu0 0.0
    %970 = vmatprep.subr.mxu0 0.0
    %971 = vmatpush1.msra.mxu0 0.0
    %972 = vmatprep.subr.mxu0 0.0
    %973 = vmatpush1.msra.mxu0 0.0
    %974 = vmatprep.subr.mxu0 0.0
    %975 = vmatpush1.msra.mxu0 0.0
    %976 = vmatprep.subr.mxu0 0.0
    %977 = vmatpush1.msra.mxu0 0.0
    %978 = vmatprep.subr.mxu0 0.0
    %979 = vmatpush1.msra.mxu0 0.0
    %980 = vmatprep.subr.mxu0 0.0
    %981 = vmatpush1.msra.mxu0 0.0
    %982 = vmatprep.subr.mxu0 0.0
    %983 = vmatpush1.msra.mxu0 0.0
    %984 = vmatprep.subr.mxu0 0.0
    %985 = vmatpush1.msra.mxu0 0.0
    %986 = vmatprep.subr.mxu0 0.0
    %987 = vmatpush1.msra.mxu0 0.0
    %988 = vmatprep.subr.mxu0 0.0
    %989 = vmatpush1.msra.mxu0 0.0
    %990 = vmatprep.subr.mxu0 0.0
    %991 = vmatpush1.msra.mxu0 0.0
    %992 = vmatprep.subr.mxu0 0.0
    %993 = vmatpush1.msra.mxu0 0.0
    %994 = vmatprep.subr.mxu0 0.0
    %995 = vmatpush1.msra.mxu0 0.0
    %996 = vmatprep.subr.mxu0 0.0
    %997 = vmatpush1.msra.mxu0 0.0
    %998 = vmatprep.subr.mxu0 0.0
    %999 = vmatpush1.msra.mxu0 0.0
    %1000 = vmatprep.subr.mxu0 0.0
    %1001 = vmatpush1.msra.mxu0 0.0
    %1002 = vmatprep.subr.mxu0 0.0
    %1003 = vmatpush1.msra.mxu0 0.0
    %1004 = vmatprep.subr.mxu0 0.0
    %1005 = vmatpush1.msra.mxu0 0.0
    %1006 = vmatprep.subr.mxu0 0.0
    %1007 = vmatpush1.msra.mxu0 0.0
    %1008 = vmatprep.subr.mxu0 0.0
    %1009 = vmatpush1.msra.mxu0 0.0
    %1010 = vmatprep.subr.mxu0 0.0
    %1011 = vmatpush1.msra.mxu0 0.0
    %1012 = vmatprep.mubr.f32.mxu0 0.0
    %1013 = vmatmul.mubr.f32.gmra.mrb[0].mxu0 %v666
    %v1014 = vpop.f32.mrb[0].mxu0
    %v1015 = vadd.f32 0.0, %v1014
    %v1016 = vpop.f32.mrb[0].mxu0
    %1017 = vdwg.mxu0
    %1018 = vmatprep.subr.mxu0 0.0
    %1019 = vmatpush1.msra.mxu0 %v417
    %1020 = vmatprep.subr.mxu0 0.0
    %1021 = vmatpush1.msra.mxu0 %v422
    %1022 = vmatprep.subr.mxu0 0.0
    %1023 = vmatpush1.msra.mxu0 0.0
    %1024 = vmatprep.subr.mxu0 0.0
    %1025 = vmatpush1.msra.mxu0 0.0
    %1026 = vmatprep.subr.mxu0 0.0
    %1027 = vmatpush1.msra.mxu0 0.0
    %1028 = vmatprep.subr.mxu0 0.0
    %1029 = vmatpush1.msra.mxu0 0.0
    %1030 = vmatprep.subr.mxu0 0.0
    %1031 = vmatpush1.msra.mxu0 0.0
    %1032 = vmatprep.subr.mxu0 0.0
    %1033 = vmatpush1.msra.mxu0 0.0
    %1034 = vmatprep.subr.mxu0 0.0
    %1035 = vmatpush1.msra.mxu0 0.0
    %1036 = vmatprep.subr.mxu0 0.0
    %1037 = vmatpush1.msra.mxu0 0.0
    %1038 = vmatprep.subr.mxu0 0.0
    %1039 = vmatpush1.msra.mxu0 0.0
    %1040 = vmatprep.subr.mxu0 0.0
    %1041 = vmatpush1.msra.mxu0 0.0
    %1042 = vmatprep.subr.mxu0 0.0
    %1043 = vmatpush1.msra.mxu0 0.0
    %1044 = vmatprep.subr.mxu0 0.0
    %1045 = vmatpush1.msra.mxu0 0.0
    %1046 = vmatprep.subr.mxu0 0.0
    %1047 = vmatpush1.msra.mxu0 0.0
    %1048 = vmatprep.subr.mxu0 0.0
    %1049 = vmatpush1.msra.mxu0 0.0
    %1050 = vmatprep.subr.mxu0 0.0
    %1051 = vmatpush1.msra.mxu0 0.0
    %1052 = vmatprep.subr.mxu0 0.0
    %1053 = vmatpush1.msra.mxu0 0.0
    %1054 = vmatprep.subr.mxu0 0.0
    %1055 = vmatpush1.msra.mxu0 0.0
    %1056 = vmatprep.subr.mxu0 0.0
    %1057 = vmatpush1.msra.mxu0 0.0
    %1058 = vmatprep.subr.mxu0 0.0
    %1059 = vmatpush1.msra.mxu0 0.0
    %1060 = vmatprep.subr.mxu0 0.0
    %1061 = vmatpush1.msra.mxu0 0.0
    %1062 = vmatprep.subr.mxu0 0.0
    %1063 = vmatpush1.msra.mxu0 0.0
    %1064 = vmatprep.subr.mxu0 0.0
    %1065 = vmatpush1.msra.mxu0 0.0
    %1066 = vmatprep.subr.mxu0 0.0
    %1067 = vmatpush1.msra.mxu0 0.0
    %1068 = vmatprep.subr.mxu0 0.0
    %1069 = vmatpush1.msra.mxu0 0.0
    %1070 = vmatprep.subr.mxu0 0.0
    %1071 = vmatpush1.msra.mxu0 0.0
    %1072 = vmatprep.subr.mxu0 0.0
    %1073 = vmatpush1.msra.mxu0 0.0
    %1074 = vmatprep.subr.mxu0 0.0
    %1075 = vmatpush1.msra.mxu0 0.0
    %1076 = vmatprep.subr.mxu0 0.0
    %1077 = vmatpush1.msra.mxu0 0.0
    %1078 = vmatprep.subr.mxu0 0.0
    %1079 = vmatpush1.msra.mxu0 0.0
    %1080 = vmatprep.subr.mxu0 0.0
    %1081 = vmatpush1.msra.mxu0 0.0
    %1082 = vmatprep.mubr.f32.mxu0 0.0
    %1083 = vmatmul.mubr.f32.gmra.mrb[0].mxu0 %v666
    %v1084 = vpop.f32.mrb[0].mxu0
    %v1085 = vadd.f32 0.0, %v1084
    %v1086 = vpop.f32.mrb[0].mxu0
    %1087 = vdwg.mxu0
    %1088 = vmatprep.subr.mxu0 0.0
    %1089 = vmatpush1.msra.mxu0 %v427
    %1090 = vmatprep.subr.mxu0 0.0
    %1091 = vmatpush1.msra.mxu0 %v432
    %1092 = vmatprep.subr.mxu0 0.0
    %1093 = vmatpush1.msra.mxu0 0.0
    %1094 = vmatprep.subr.mxu0 0.0
    %1095 = vmatpush1.msra.mxu0 0.0
    %1096 = vmatprep.subr.mxu0 0.0
    %1097 = vmatpush1.msra.mxu0 0.0
    %1098 = vmatprep.subr.mxu0 0.0
    %1099 = vmatpush1.msra.mxu0 0.0
    %1100 = vmatprep.subr.mxu0 0.0
    %1101 = vmatpush1.msra.mxu0 0.0
    %1102 = vmatprep.subr.mxu0 0.0
    %1103 = vmatpush1.msra.mxu0 0.0
    %1104 = vmatprep.subr.mxu0 0.0
    %1105 = vmatpush1.msra.mxu0 0.0
    %1106 = vmatprep.subr.mxu0 0.0
    %1107 = vmatpush1.msra.mxu0 0.0
    %1108 = vmatprep.subr.mxu0 0.0
    %1109 = vmatpush1.msra.mxu0 0.0
    %1110 = vmatprep.subr.mxu0 0.0
    %1111 = vmatpush1.msra.mxu0 0.0
    %1112 = vmatprep.subr.mxu0 0.0
    %1113 = vmatpush1.msra.mxu0 0.0
    %1114 = vmatprep.subr.mxu0 0.0
    %1115 = vmatpush1.msra.mxu0 0.0
    %1116 = vmatprep.subr.mxu0 0.0
    %1117 = vmatpush1.msra.mxu0 0.0
    %1118 = vmatprep.subr.mxu0 0.0
    %1119 = vmatpush1.msra.mxu0 0.0
    %1120 = vmatprep.subr.mxu0 0.0
    %1121 = vmatpush1.msra.mxu0 0.0
    %1122 = vmatprep.subr.mxu0 0.0
    %1123 = vmatpush1.msra.mxu0 0.0
    %1124 = vmatprep.subr.mxu0 0.0
    %1125 = vmatpush1.msra.mxu0 0.0
    %1126 = vmatprep.subr.mxu0 0.0
    %1127 = vmatpush1.msra.mxu0 0.0
    %1128 = vmatprep.subr.mxu0 0.0
    %1129 = vmatpush1.msra.mxu0 0.0
    %1130 = vmatprep.subr.mxu0 0.0
    %1131 = vmatpush1.msra.mxu0 0.0
    %1132 = vmatprep.subr.mxu0 0.0
    %1133 = vmatpush1.msra.mxu0 0.0
    %1134 = vmatprep.subr.mxu0 0.0
    %1135 = vmatpush1.msra.mxu0 0.0
    %1136 = vmatprep.subr.mxu0 0.0
    %1137 = vmatpush1.msra.mxu0 0.0
    %1138 = vmatprep.subr.mxu0 0.0
    %1139 = vmatpush1.msra.mxu0 0.0
    %1140 = vmatprep.subr.mxu0 0.0
    %1141 = vmatpush1.msra.mxu0 0.0
    %1142 = vmatprep.subr.mxu0 0.0
    %1143 = vmatpush1.msra.mxu0 0.0
    %1144 = vmatprep.subr.mxu0 0.0
    %1145 = vmatpush1.msra.mxu0 0.0
    %1146 = vmatprep.subr.mxu0 0.0
    %1147 = vmatpush1.msra.mxu0 0.0
    %1148 = vmatprep.subr.mxu0 0.0
    %1149 = vmatpush1.msra.mxu0 0.0
    %1150 = vmatprep.subr.mxu0 0.0
    %1151 = vmatpush1.msra.mxu0 0.0
    %1152 = vmatprep.mubr.f32.mxu0 0.0
    %1153 = vmatmul.mubr.f32.gmra.mrb[0].mxu0 %v666
    %v1154 = vpop.f32.mrb[0].mxu0
    %v1155 = vadd.f32 0.0, %v1154
    %v1156 = vpop.f32.mrb[0].mxu0
    %1157 = vdwg.mxu0
    %1158 = vmatprep.subr.mxu0 0.0
    %1159 = vmatpush1.msra.mxu0 %v437
    %1160 = vmatprep.subr.mxu0 0.0
    %1161 = vmatpush1.msra.mxu0 %v442
    %1162 = vmatprep.subr.mxu0 0.0
    %1163 = vmatpush1.msra.mxu0 0.0
    %1164 = vmatprep.subr.mxu0 0.0
    %1165 = vmatpush1.msra.mxu0 0.0
    %1166 = vmatprep.subr.mxu0 0.0
    %1167 = vmatpush1.msra.mxu0 0.0
    %1168 = vmatprep.subr.mxu0 0.0
    %1169 = vmatpush1.msra.mxu0 0.0
    %1170 = vmatprep.subr.mxu0 0.0
    %1171 = vmatpush1.msra.mxu0 0.0
    %1172 = vmatprep.subr.mxu0 0.0
    %1173 = vmatpush1.msra.mxu0 0.0
    %1174 = vmatprep.subr.mxu0 0.0
    %1175 = vmatpush1.msra.mxu0 0.0
    %1176 = vmatprep.subr.mxu0 0.0
    %1177 = vmatpush1.msra.mxu0 0.0
    %1178 = vmatprep.subr.mxu0 0.0
    %1179 = vmatpush1.msra.mxu0 0.0
    %1180 = vmatprep.subr.mxu0 0.0
    %1181 = vmatpush1.msra.mxu0 0.0
    %1182 = vmatprep.subr.mxu0 0.0
    %1183 = vmatpush1.msra.mxu0 0.0
    %1184 = vmatprep.subr.mxu0 0.0
    %1185 = vmatpush1.msra.mxu0 0.0
    %1186 = vmatprep.subr.mxu0 0.0
    %1187 = vmatpush1.msra.mxu0 0.0
    %1188 = vmatprep.subr.mxu0 0.0
    %1189 = vmatpush1.msra.mxu0 0.0
    %1190 = vmatprep.subr.mxu0 0.0
    %1191 = vmatpush1.msra.mxu0 0.0
    %1192 = vmatprep.subr.mxu0 0.0
    %1193 = vmatpush1.msra.mxu0 0.0
    %1194 = vmatprep.subr.mxu0 0.0
    %1195 = vmatpush1.msra.mxu0 0.0
    %1196 = vmatprep.subr.mxu0 0.0
    %1197 = vmatpush1.msra.mxu0 0.0
    %1198 = vmatprep.subr.mxu0 0.0
    %1199 = vmatpush1.msra.mxu0 0.0
    %1200 = vmatprep.subr.mxu0 0.0
    %1201 = vmatpush1.msra.mxu0 0.0
    %1202 = vmatprep.subr.mxu0 0.0
    %1203 = vmatpush1.msra.mxu0 0.0
    %1204 = vmatprep.subr.mxu0 0.0
    %1205 = vmatpush1.msra.mxu0 0.0
    %1206 = vmatprep.subr.mxu0 0.0
    %1207 = vmatpush1.msra.mxu0 0.0
    %1208 = vmatprep.subr.mxu0 0.0
    %1209 = vmatpush1.msra.mxu0 0.0
    %1210 = vmatprep.subr.mxu0 0.0
    %1211 = vmatpush1.msra.mxu0 0.0
    %1212 = vmatprep.subr.mxu0 0.0
    %1213 = vmatpush1.msra.mxu0 0.0
    %1214 = vmatprep.subr.mxu0 0.0
    %1215 = vmatpush1.msra.mxu0 0.0
    %1216 = vmatprep.subr.mxu0 0.0
    %1217 = vmatpush1.msra.mxu0 0.0
    %1218 = vmatprep.subr.mxu0 0.0
    %1219 = vmatpush1.msra.mxu0 0.0
    %1220 = vmatprep.subr.mxu0 0.0
    %1221 = vmatpush1.msra.mxu0 0.0
    %1222 = vmatprep.mubr.f32.mxu0 0.0
    %1223 = vmatmul.mubr.f32.gmra.mrb[0].mxu0 %v666
    %v1224 = vpop.f32.mrb[0].mxu0
    %v1225 = vadd.f32 0.0, %v1224
    %v1226 = vpop.f32.mrb[0].mxu0
    %1227 = vdwg.mxu0
    %1228 = vmatprep.subr.mxu0 0.0
    %1229 = vmatpush1.msra.mxu0 %v447
    %1230 = vmatprep.subr.mxu0 0.0
    %1231 = vmatpush1.msra.mxu0 %v452
    %1232 = vmatprep.subr.mxu0 0.0
    %1233 = vmatpush1.msra.mxu0 0.0
    %1234 = vmatprep.subr.mxu0 0.0
    %1235 = vmatpush1.msra.mxu0 0.0
    %1236 = vmatprep.subr.mxu0 0.0
    %1237 = vmatpush1.msra.mxu0 0.0
    %1238 = vmatprep.subr.mxu0 0.0
    %1239 = vmatpush1.msra.mxu0 0.0
    %1240 = vmatprep.subr.mxu0 0.0
    %1241 = vmatpush1.msra.mxu0 0.0
    %1242 = vmatprep.subr.mxu0 0.0
    %1243 = vmatpush1.msra.mxu0 0.0
    %1244 = vmatprep.subr.mxu0 0.0
    %1245 = vmatpush1.msra.mxu0 0.0
    %1246 = vmatprep.subr.mxu0 0.0
    %1247 = vmatpush1.msra.mxu0 0.0
    %1248 = vmatprep.subr.mxu0 0.0
    %1249 = vmatpush1.msra.mxu0 0.0
    %1250 = vmatprep.subr.mxu0 0.0
    %1251 = vmatpush1.msra.mxu0 0.0
    %1252 = vmatprep.subr.mxu0 0.0
    %1253 = vmatpush1.msra.mxu0 0.0
    %1254 = vmatprep.subr.mxu0 0.0
    %1255 = vmatpush1.msra.mxu0 0.0
    %1256 = vmatprep.subr.mxu0 0.0
    %1257 = vmatpush1.msra.mxu0 0.0
    %1258 = vmatprep.subr.mxu0 0.0
    %1259 = vmatpush1.msra.mxu0 0.0
    %1260 = vmatprep.subr.mxu0 0.0
    %1261 = vmatpush1.msra.mxu0 0.0
    %1262 = vmatprep.subr.mxu0 0.0
    %1263 = vmatpush1.msra.mxu0 0.0
    %1264 = vmatprep.subr.mxu0 0.0
    %1265 = vmatpush1.msra.mxu0 0.0
    %1266 = vmatprep.subr.mxu0 0.0
    %1267 = vmatpush1.msra.mxu0 0.0
    %1268 = vmatprep.subr.mxu0 0.0
    %1269 = vmatpush1.msra.mxu0 0.0
    %1270 = vmatprep.subr.mxu0 0.0
    %1271 = vmatpush1.msra.mxu0 0.0
    %1272 = vmatprep.subr.mxu0 0.0
    %1273 = vmatpush1.msra.mxu0 0.0
    %1274 = vmatprep.subr.mxu0 0.0
    %1275 = vmatpush1.msra.mxu0 0.0
    %1276 = vmatprep.subr.mxu0 0.0
    %1277 = vmatpush1.msra.mxu0 0.0
    %1278 = vmatprep.subr.mxu0 0.0
    %1279 = vmatpush1.msra.mxu0 0.0
    %1280 = vmatprep.subr.mxu0 0.0
    %1281 = vmatpush1.msra.mxu0 0.0
    %1282 = vmatprep.subr.mxu0 0.0
    %1283 = vmatpush1.msra.mxu0 0.0
    %1284 = vmatprep.subr.mxu0 0.0
    %1285 = vmatpush1.msra.mxu0 0.0
    %1286 = vmatprep.subr.mxu0 0.0
    %1287 = vmatpush1.msra.mxu0 0.0
    %1288 = vmatprep.subr.mxu0 0.0
    %1289 = vmatpush1.msra.mxu0 0.0
    %1290 = vmatprep.subr.mxu0 0.0
    %1291 = vmatpush1.msra.mxu0 0.0
    %1292 = vmatprep.mubr.f32.mxu0 0.0
    %1293 = vmatmul.mubr.f32.gmra.mrb[0].mxu0 %v666
    %v1294 = vpop.f32.mrb[0].mxu0
    %v1295 = vadd.f32 0.0, %v1294
    %v1296 = vpop.f32.mrb[0].mxu0
    %1297 = vdwg.mxu0
    %1298 = vmatprep.subr.mxu0 0.0
    %1299 = vmatpush1.msra.mxu0 %v457
    %1300 = vmatprep.subr.mxu0 0.0
    %1301 = vmatpush1.msra.mxu0 %v462
    %1302 = vmatprep.subr.mxu0 0.0
    %1303 = vmatpush1.msra.mxu0 0.0
    %1304 = vmatprep.subr.mxu0 0.0
    %1305 = vmatpush1.msra.mxu0 0.0
    %1306 = vmatprep.subr.mxu0 0.0
    %1307 = vmatpush1.msra.mxu0 0.0
    %1308 = vmatprep.subr.mxu0 0.0
    %1309 = vmatpush1.msra.mxu0 0.0
    %1310 = vmatprep.subr.mxu0 0.0
    %1311 = vmatpush1.msra.mxu0 0.0
    %1312 = vmatprep.subr.mxu0 0.0
    %1313 = vmatpush1.msra.mxu0 0.0
    %1314 = vmatprep.subr.mxu0 0.0
    %1315 = vmatpush1.msra.mxu0 0.0
    %1316 = vmatprep.subr.mxu0 0.0
    %1317 = vmatpush1.msra.mxu0 0.0
    %1318 = vmatprep.subr.mxu0 0.0
    %1319 = vmatpush1.msra.mxu0 0.0
    %1320 = vmatprep.subr.mxu0 0.0
    %1321 = vmatpush1.msra.mxu0 0.0
    %1322 = vmatprep.subr.mxu0 0.0
    %1323 = vmatpush1.msra.mxu0 0.0
    %1324 = vmatprep.subr.mxu0 0.0
    %1325 = vmatpush1.msra.mxu0 0.0
    %1326 = vmatprep.subr.mxu0 0.0
    %1327 = vmatpush1.msra.mxu0 0.0
    %1328 = vmatprep.subr.mxu0 0.0
    %1329 = vmatpush1.msra.mxu0 0.0
    %1330 = vmatprep.subr.mxu0 0.0
    %1331 = vmatpush1.msra.mxu0 0.0
    %1332 = vmatprep.subr.mxu0 0.0
    %1333 = vmatpush1.msra.mxu0 0.0
    %1334 = vmatprep.subr.mxu0 0.0
    %1335 = vmatpush1.msra.mxu0 0.0
    %1336 = vmatprep.subr.mxu0 0.0
    %1337 = vmatpush1.msra.mxu0 0.0
    %1338 = vmatprep.subr.mxu0 0.0
    %1339 = vmatpush1.msra.mxu0 0.0
    %1340 = vmatprep.subr.mxu0 0.0
    %1341 = vmatpush1.msra.mxu0 0.0
    %1342 = vmatprep.subr.mxu0 0.0
    %1343 = vmatpush1.msra.mxu0 0.0
    %1344 = vmatprep.subr.mxu0 0.0
    %1345 = vmatpush1.msra.mxu0 0.0
    %1346 = vmatprep.subr.mxu0 0.0
    %1347 = vmatpush1.msra.mxu0 0.0
    %1348 = vmatprep.subr.mxu0 0.0
    %1349 = vmatpush1.msra.mxu0 0.0
    %1350 = vmatprep.subr.mxu0 0.0
    %1351 = vmatpush1.msra.mxu0 0.0
    %1352 = vmatprep.subr.mxu0 0.0
    %1353 = vmatpush1.msra.mxu0 0.0
    %1354 = vmatprep.subr.mxu0 0.0
    %1355 = vmatpush1.msra.mxu0 0.0
    %1356 = vmatprep.subr.mxu0 0.0
    %1357 = vmatpush1.msra.mxu0 0.0
    %1358 = vmatprep.subr.mxu0 0.0
    %1359 = vmatpush1.msra.mxu0 0.0
    %1360 = vmatprep.subr.mxu0 0.0
    %1361 = vmatpush1.msra.mxu0 0.0
    %1362 = vmatprep.mubr.f32.mxu0 0.0
    %1363 = vmatmul.mubr.f32.gmra.mrb[0].mxu0 %v666
    %v1364 = vpop.f32.mrb[0].mxu0
    %v1365 = vadd.f32 0.0, %v1364
    %v1366 = vpop.f32.mrb[0].mxu0
    %1367 = vdwg.mxu0
    %1368 = vmatprep.subr.mxu0 0.0
    %1369 = vmatpush1.msra.mxu0 %v467
    %1370 = vmatprep.subr.mxu0 0.0
    %1371 = vmatpush1.msra.mxu0 %v472
    %1372 = vmatprep.subr.mxu0 0.0
    %1373 = vmatpush1.msra.mxu0 0.0
    %1374 = vmatprep.subr.mxu0 0.0
    %1375 = vmatpush1.msra.mxu0 0.0
    %1376 = vmatprep.subr.mxu0 0.0
    %1377 = vmatpush1.msra.mxu0 0.0
    %1378 = vmatprep.subr.mxu0 0.0
    %1379 = vmatpush1.msra.mxu0 0.0
    %1380 = vmatprep.subr.mxu0 0.0
    %1381 = vmatpush1.msra.mxu0 0.0
    %1382 = vmatprep.subr.mxu0 0.0
    %1383 = vmatpush1.msra.mxu0 0.0
    %1384 = vmatprep.subr.mxu0 0.0
    %1385 = vmatpush1.msra.mxu0 0.0
    %1386 = vmatprep.subr.mxu0 0.0
    %1387 = vmatpush1.msra.mxu0 0.0
    %1388 = vmatprep.subr.mxu0 0.0
    %1389 = vmatpush1.msra.mxu0 0.0
    %1390 = vmatprep.subr.mxu0 0.0
    %1391 = vmatpush1.msra.mxu0 0.0
    %1392 = vmatprep.subr.mxu0 0.0
    %1393 = vmatpush1.msra.mxu0 0.0
    %1394 = vmatprep.subr.mxu0 0.0
    %1395 = vmatpush1.msra.mxu0 0.0
    %1396 = vmatprep.subr.mxu0 0.0
    %1397 = vmatpush1.msra.mxu0 0.0
    %1398 = vmatprep.subr.mxu0 0.0
    %1399 = vmatpush1.msra.mxu0 0.0
    %1400 = vmatprep.subr.mxu0 0.0
    %1401 = vmatpush1.msra.mxu0 0.0
    %1402 = vmatprep.subr.mxu0 0.0
    %1403 = vmatpush1.msra.mxu0 0.0
    %1404 = vmatprep.subr.mxu0 0.0
    %1405 = vmatpush1.msra.mxu0 0.0
    %1406 = vmatprep.subr.mxu0 0.0
    %1407 = vmatpush1.msra.mxu0 0.0
    %1408 = vmatprep.subr.mxu0 0.0
    %1409 = vmatpush1.msra.mxu0 0.0
    %1410 = vmatprep.subr.mxu0 0.0
    %1411 = vmatpush1.msra.mxu0 0.0
    %1412 = vmatprep.subr.mxu0 0.0
    %1413 = vmatpush1.msra.mxu0 0.0
    %1414 = vmatprep.subr.mxu0 0.0
    %1415 = vmatpush1.msra.mxu0 0.0
    %1416 = vmatprep.subr.mxu0 0.0
    %1417 = vmatpush1.msra.mxu0 0.0
    %1418 = vmatprep.subr.mxu0 0.0
    %1419 = vmatpush1.msra.mxu0 0.0
    %1420 = vmatprep.subr.mxu0 0.0
    %1421 = vmatpush1.msra.mxu0 0.0
    %1422 = vmatprep.subr.mxu0 0.0
    %1423 = vmatpush1.msra.mxu0 0.0
    %1424 = vmatprep.subr.mxu0 0.0
    %1425 = vmatpush1.msra.mxu0 0.0
    %1426 = vmatprep.subr.mxu0 0.0
    %1427 = vmatpush1.msra.mxu0 0.0
    %1428 = vmatprep.subr.mxu0 0.0
    %1429 = vmatpush1.msra.mxu0 0.0
    %1430 = vmatprep.subr.mxu0 0.0
    %1431 = vmatpush1.msra.mxu0 0.0
    %1432 = vmatprep.mubr.f32.mxu0 0.0
    %1433 = vmatmul.mubr.f32.gmra.mrb[0].mxu0 %v666
    %v1434 = vpop.f32.mrb[0].mxu0
    %v1435 = vadd.f32 0.0, %v1434
    %v1436 = vpop.f32.mrb[0].mxu0
    %1437 = vdwg.mxu0
    %1438 = vmatprep.subr.mxu0 0.0
    %1439 = vmatpush1.msra.mxu0 %v477
    %1440 = vmatprep.subr.mxu0 0.0
    %1441 = vmatpush1.msra.mxu0 %v482
    %1442 = vmatprep.subr.mxu0 0.0
    %1443 = vmatpush1.msra.mxu0 0.0
    %1444 = vmatprep.subr.mxu0 0.0
    %1445 = vmatpush1.msra.mxu0 0.0
    %1446 = vmatprep.subr.mxu0 0.0
    %1447 = vmatpush1.msra.mxu0 0.0
    %1448 = vmatprep.subr.mxu0 0.0
    %1449 = vmatpush1.msra.mxu0 0.0
    %1450 = vmatprep.subr.mxu0 0.0
    %1451 = vmatpush1.msra.mxu0 0.0
    %1452 = vmatprep.subr.mxu0 0.0
    %1453 = vmatpush1.msra.mxu0 0.0
    %1454 = vmatprep.subr.mxu0 0.0
    %1455 = vmatpush1.msra.mxu0 0.0
    %1456 = vmatprep.subr.mxu0 0.0
    %1457 = vmatpush1.msra.mxu0 0.0
    %1458 = vmatprep.subr.mxu0 0.0
    %1459 = vmatpush1.msra.mxu0 0.0
    %1460 = vmatprep.subr.mxu0 0.0
    %1461 = vmatpush1.msra.mxu0 0.0
    %1462 = vmatprep.subr.mxu0 0.0
    %1463 = vmatpush1.msra.mxu0 0.0
    %1464 = vmatprep.subr.mxu0 0.0
    %1465 = vmatpush1.msra.mxu0 0.0
    %1466 = vmatprep.subr.mxu0 0.0
    %1467 = vmatpush1.msra.mxu0 0.0
    %1468 = vmatprep.subr.mxu0 0.0
    %1469 = vmatpush1.msra.mxu0 0.0
    %1470 = vmatprep.subr.mxu0 0.0
    %1471 = vmatpush1.msra.mxu0 0.0
    %1472 = vmatprep.subr.mxu0 0.0
    %1473 = vmatpush1.msra.mxu0 0.0
    %1474 = vmatprep.subr.mxu0 0.0
    %1475 = vmatpush1.msra.mxu0 0.0
    %1476 = vmatprep.subr.mxu0 0.0
    %1477 = vmatpush1.msra.mxu0 0.0
    %1478 = vmatprep.subr.mxu0 0.0
    %1479 = vmatpush1.msra.mxu0 0.0
    %1480 = vmatprep.subr.mxu0 0.0
    %1481 = vmatpush1.msra.mxu0 0.0
    %1482 = vmatprep.subr.mxu0 0.0
    %1483 = vmatpush1.msra.mxu0 0.0
    %1484 = vmatprep.subr.mxu0 0.0
    %1485 = vmatpush1.msra.mxu0 0.0
    %1486 = vmatprep.subr.mxu0 0.0
    %1487 = vmatpush1.msra.mxu0 0.0
    %1488 = vmatprep.subr.mxu0 0.0
    %1489 = vmatpush1.msra.mxu0 0.0
    %1490 = vmatprep.subr.mxu0 0.0
    %1491 = vmatpush1.msra.mxu0 0.0
    %1492 = vmatprep.subr.mxu0 0.0
    %1493 = vmatpush1.msra.mxu0 0.0
    %1494 = vmatprep.subr.mxu0 0.0
    %1495 = vmatpush1.msra.mxu0 0.0
    %1496 = vmatprep.subr.mxu0 0.0
    %1497 = vmatpush1.msra.mxu0 0.0
    %1498 = vmatprep.subr.mxu0 0.0
    %1499 = vmatpush1.msra.mxu0 0.0
    %1500 = vmatprep.subr.mxu0 0.0
    %1501 = vmatpush1.msra.mxu0 0.0
    %1502 = vmatprep.mubr.f32.mxu0 0.0
    %1503 = vmatmul.mubr.f32.gmra.mrb[0].mxu0 %v666
    %v1504 = vpop.f32.mrb[0].mxu0
    %v1505 = vadd.f32 0.0, %v1504
    %v1506 = vpop.f32.mrb[0].mxu0
    %1507 = vdwg.mxu0
    %1508 = vmatprep.subr.mxu0 0.0
    %1509 = vmatpush1.msra.mxu0 %v487
    %1510 = vmatprep.subr.mxu0 0.0
    %1511 = vmatpush1.msra.mxu0 %v492
    %1512 = vmatprep.subr.mxu0 0.0
    %1513 = vmatpush1.msra.mxu0 0.0
    %1514 = vmatprep.subr.mxu0 0.0
    %1515 = vmatpush1.msra.mxu0 0.0
    %1516 = vmatprep.subr.mxu0 0.0
    %1517 = vmatpush1.msra.mxu0 0.0
    %1518 = vmatprep.subr.mxu0 0.0
    %1519 = vmatpush1.msra.mxu0 0.0
    %1520 = vmatprep.subr.mxu0 0.0
    %1521 = vmatpush1.msra.mxu0 0.0
    %1522 = vmatprep.subr.mxu0 0.0
    %1523 = vmatpush1.msra.mxu0 0.0
    %1524 = vmatprep.subr.mxu0 0.0
    %1525 = vmatpush1.msra.mxu0 0.0
    %1526 = vmatprep.subr.mxu0 0.0
    %1527 = vmatpush1.msra.mxu0 0.0
    %1528 = vmatprep.subr.mxu0 0.0
    %1529 = vmatpush1.msra.mxu0 0.0
    %1530 = vmatprep.subr.mxu0 0.0
    %1531 = vmatpush1.msra.mxu0 0.0
    %1532 = vmatprep.subr.mxu0 0.0
    %1533 = vmatpush1.msra.mxu0 0.0
    %1534 = vmatprep.subr.mxu0 0.0
    %1535 = vmatpush1.msra.mxu0 0.0
    %1536 = vmatprep.subr.mxu0 0.0
    %1537 = vmatpush1.msra.mxu0 0.0
    %1538 = vmatprep.subr.mxu0 0.0
    %1539 = vmatpush1.msra.mxu0 0.0
    %1540 = vmatprep.subr.mxu0 0.0
    %1541 = vmatpush1.msra.mxu0 0.0
    %1542 = vmatprep.subr.mxu0 0.0
    %1543 = vmatpush1.msra.mxu0 0.0
    %1544 = vmatprep.subr.mxu0 0.0
    %1545 = vmatpush1.msra.mxu0 0.0
    %1546 = vmatprep.subr.mxu0 0.0
    %1547 = vmatpush1.msra.mxu0 0.0
    %1548 = vmatprep.subr.mxu0 0.0
    %1549 = vmatpush1.msra.mxu0 0.0
    %1550 = vmatprep.subr.mxu0 0.0
    %1551 = vmatpush1.msra.mxu0 0.0
    %1552 = vmatprep.subr.mxu0 0.0
    %1553 = vmatpush1.msra.mxu0 0.0
    %1554 = vmatprep.subr.mxu0 0.0
    %1555 = vmatpush1.msra.mxu0 0.0
    %1556 = vmatprep.subr.mxu0 0.0
    %1557 = vmatpush1.msra.mxu0 0.0
    %1558 = vmatprep.subr.mxu0 0.0
    %1559 = vmatpush1.msra.mxu0 0.0
    %1560 = vmatprep.subr.mxu0 0.0
    %1561 = vmatpush1.msra.mxu0 0.0
    %1562 = vmatprep.subr.mxu0 0.0
    %1563 = vmatpush1.msra.mxu0 0.0
    %1564 = vmatprep.subr.mxu0 0.0
    %1565 = vmatpush1.msra.mxu0 0.0
    %1566 = vmatprep.subr.mxu0 0.0
    %1567 = vmatpush1.msra.mxu0 0.0
    %1568 = vmatprep.subr.mxu0 0.0
    %1569 = vmatpush1.msra.mxu0 0.0
    %1570 = vmatprep.subr.mxu0 0.0
    %1571 = vmatpush1.msra.mxu0 0.0
    %1572 = vmatprep.mubr.f32.mxu0 0.0
    %1573 = vmatmul.mubr.f32.gmra.mrb[0].mxu0 %v666
    %v1574 = vpop.f32.mrb[0].mxu0
    %v1575 = vadd.f32 0.0, %v1574
    %v1576 = vpop.f32.mrb[0].mxu0
    %1577 = vdwg.mxu0
    %1578 = vmatprep.subr.mxu0 0.0
    %1579 = vmatpush1.msra.mxu0 %v497
    %1580 = vmatprep.subr.mxu0 0.0
    %1581 = vmatpush1.msra.mxu0 %v502
    %1582 = vmatprep.subr.mxu0 0.0
    %1583 = vmatpush1.msra.mxu0 0.0
    %1584 = vmatprep.subr.mxu0 0.0
    %1585 = vmatpush1.msra.mxu0 0.0
    %1586 = vmatprep.subr.mxu0 0.0
    %1587 = vmatpush1.msra.mxu0 0.0
    %1588 = vmatprep.subr.mxu0 0.0
    %1589 = vmatpush1.msra.mxu0 0.0
    %1590 = vmatprep.subr.mxu0 0.0
    %1591 = vmatpush1.msra.mxu0 0.0
    %1592 = vmatprep.subr.mxu0 0.0
    %1593 = vmatpush1.msra.mxu0 0.0
    %1594 = vmatprep.subr.mxu0 0.0
    %1595 = vmatpush1.msra.mxu0 0.0
    %1596 = vmatprep.subr.mxu0 0.0
    %1597 = vmatpush1.msra.mxu0 0.0
    %1598 = vmatprep.subr.mxu0 0.0
    %1599 = vmatpush1.msra.mxu0 0.0
    %1600 = vmatprep.subr.mxu0 0.0
    %1601 = vmatpush1.msra.mxu0 0.0
    %1602 = vmatprep.subr.mxu0 0.0
    %1603 = vmatpush1.msra.mxu0 0.0
    %1604 = vmatprep.subr.mxu0 0.0
    %1605 = vmatpush1.msra.mxu0 0.0
    %1606 = vmatprep.subr.mxu0 0.0
    %1607 = vmatpush1.msra.mxu0 0.0
    %1608 = vmatprep.subr.mxu0 0.0
    %1609 = vmatpush1.msra.mxu0 0.0
    %1610 = vmatprep.subr.mxu0 0.0
    %1611 = vmatpush1.msra.mxu0 0.0
    %1612 = vmatprep.subr.mxu0 0.0
    %1613 = vmatpush1.msra.mxu0 0.0
    %1614 = vmatprep.subr.mxu0 0.0
    %1615 = vmatpush1.msra.mxu0 0.0
    %1616 = vmatprep.subr.mxu0 0.0
    %1617 = vmatpush1.msra.mxu0 0.0
    %1618 = vmatprep.subr.mxu0 0.0
    %1619 = vmatpush1.msra.mxu0 0.0
    %1620 = vmatprep.subr.mxu0 0.0
    %1621 = vmatpush1.msra.mxu0 0.0
    %1622 = vmatprep.subr.mxu0 0.0
    %1623 = vmatpush1.msra.mxu0 0.0
    %1624 = vmatprep.subr.mxu0 0.0
    %1625 = vmatpush1.msra.mxu0 0.0
    %1626 = vmatprep.subr.mxu0 0.0
    %1627 = vmatpush1.msra.mxu0 0.0
    %1628 = vmatprep.subr.mxu0 0.0
    %1629 = vmatpush1.msra.mxu0 0.0
    %1630 = vmatprep.subr.mxu0 0.0
    %1631 = vmatpush1.msra.mxu0 0.0
    %1632 = vmatprep.subr.mxu0 0.0
    %1633 = vmatpush1.msra.mxu0 0.0
    %1634 = vmatprep.subr.mxu0 0.0
    %1635 = vmatpush1.msra.mxu0 0.0
    %1636 = vmatprep.subr.mxu0 0.0
    %1637 = vmatpush1.msra.mxu0 0.0
    %1638 = vmatprep.subr.mxu0 0.0
    %1639 = vmatpush1.msra.mxu0 0.0
    %1640 = vmatprep.subr.mxu0 0.0
    %1641 = vmatpush1.msra.mxu0 0.0
    %1642 = vmatprep.mubr.f32.mxu0 0.0
    %1643 = vmatmul.mubr.f32.gmra.mrb[0].mxu0 %v666
    %v1644 = vpop.f32.mrb[0].mxu0
    %v1645 = vadd.f32 0.0, %v1644
    %v1646 = vpop.f32.mrb[0].mxu0
    %1647 = vdwg.mxu0
    %1648 = vmatprep.subr.mxu0 0.0
    %1649 = vmatpush1.msra.mxu0 %v507
    %1650 = vmatprep.subr.mxu0 0.0
    %1651 = vmatpush1.msra.mxu0 %v512
    %1652 = vmatprep.subr.mxu0 0.0
    %1653 = vmatpush1.msra.mxu0 0.0
    %1654 = vmatprep.subr.mxu0 0.0
    %1655 = vmatpush1.msra.mxu0 0.0
    %1656 = vmatprep.subr.mxu0 0.0
    %1657 = vmatpush1.msra.mxu0 0.0
    %1658 = vmatprep.subr.mxu0 0.0
    %1659 = vmatpush1.msra.mxu0 0.0
    %1660 = vmatprep.subr.mxu0 0.0
    %1661 = vmatpush1.msra.mxu0 0.0
    %1662 = vmatprep.subr.mxu0 0.0
    %1663 = vmatpush1.msra.mxu0 0.0
    %1664 = vmatprep.subr.mxu0 0.0
    %1665 = vmatpush1.msra.mxu0 0.0
    %1666 = vmatprep.subr.mxu0 0.0
    %1667 = vmatpush1.msra.mxu0 0.0
    %1668 = vmatprep.subr.mxu0 0.0
    %1669 = vmatpush1.msra.mxu0 0.0
    %1670 = vmatprep.subr.mxu0 0.0
    %1671 = vmatpush1.msra.mxu0 0.0
    %1672 = vmatprep.subr.mxu0 0.0
    %1673 = vmatpush1.msra.mxu0 0.0
    %1674 = vmatprep.subr.mxu0 0.0
    %1675 = vmatpush1.msra.mxu0 0.0
    %1676 = vmatprep.subr.mxu0 0.0
    %1677 = vmatpush1.msra.mxu0 0.0
    %1678 = vmatprep.subr.mxu0 0.0
    %1679 = vmatpush1.msra.mxu0 0.0
    %1680 = vmatprep.subr.mxu0 0.0
    %1681 = vmatpush1.msra.mxu0 0.0
    %1682 = vmatprep.subr.mxu0 0.0
    %1683 = vmatpush1.msra.mxu0 0.0
    %1684 = vmatprep.subr.mxu0 0.0
    %1685 = vmatpush1.msra.mxu0 0.0
    %1686 = vmatprep.subr.mxu0 0.0
    %1687 = vmatpush1.msra.mxu0 0.0
    %1688 = vmatprep.subr.mxu0 0.0
    %1689 = vmatpush1.msra.mxu0 0.0
    %1690 = vmatprep.subr.mxu0 0.0
    %1691 = vmatpush1.msra.mxu0 0.0
    %1692 = vmatprep.subr.mxu0 0.0
    %1693 = vmatpush1.msra.mxu0 0.0
    %1694 = vmatprep.subr.mxu0 0.0
    %1695 = vmatpush1.msra.mxu0 0.0
    %1696 = vmatprep.subr.mxu0 0.0
    %1697 = vmatpush1.msra.mxu0 0.0
    %1698 = vmatprep.subr.mxu0 0.0
    %1699 = vmatpush1.msra.mxu0 0.0
    %1700 = vmatprep.subr.mxu0 0.0
    %1701 = vmatpush1.msra.mxu0 0.0
    %1702 = vmatprep.subr.mxu0 0.0
    %1703 = vmatpush1.msra.mxu0 0.0
    %1704 = vmatprep.subr.mxu0 0.0
    %1705 = vmatpush1.msra.mxu0 0.0
    %1706 = vmatprep.subr.mxu0 0.0
    %1707 = vmatpush1.msra.mxu0 0.0
    %1708 = vmatprep.subr.mxu0 0.0
    %1709 = vmatpush1.msra.mxu0 0.0
    %1710 = vmatprep.subr.mxu0 0.0
    %1711 = vmatpush1.msra.mxu0 0.0
    %1712 = vmatprep.mubr.f32.mxu0 0.0
    %1713 = vmatmul.mubr.f32.gmra.mrb[0].mxu0 %v666
    %v1714 = vpop.f32.mrb[0].mxu0
    %v1715 = vadd.f32 0.0, %v1714
    %v1716 = vpop.f32.mrb[0].mxu0
    %1717 = vdwg.mxu0
    %1718 = vmatprep.subr.mxu0 0.0
    %1719 = vmatpush1.msra.mxu0 %v517
    %1720 = vmatprep.subr.mxu0 0.0
    %1721 = vmatpush1.msra.mxu0 %v522
    %1722 = vmatprep.subr.mxu0 0.0
    %1723 = vmatpush1.msra.mxu0 0.0
    %1724 = vmatprep.subr.mxu0 0.0
    %1725 = vmatpush1.msra.mxu0 0.0
    %1726 = vmatprep.subr.mxu0 0.0
    %1727 = vmatpush1.msra.mxu0 0.0
    %1728 = vmatprep.subr.mxu0 0.0
    %1729 = vmatpush1.msra.mxu0 0.0
    %1730 = vmatprep.subr.mxu0 0.0
    %1731 = vmatpush1.msra.mxu0 0.0
    %1732 = vmatprep.subr.mxu0 0.0
    %1733 = vmatpush1.msra.mxu0 0.0
    %1734 = vmatprep.subr.mxu0 0.0
    %1735 = vmatpush1.msra.mxu0 0.0
    %1736 = vmatprep.subr.mxu0 0.0
    %1737 = vmatpush1.msra.mxu0 0.0
    %1738 = vmatprep.subr.mxu0 0.0
    %1739 = vmatpush1.msra.mxu0 0.0
    %1740 = vmatprep.subr.mxu0 0.0
    %1741 = vmatpush1.msra.mxu0 0.0
    %1742 = vmatprep.subr.mxu0 0.0
    %1743 = vmatpush1.msra.mxu0 0.0
    %1744 = vmatprep.subr.mxu0 0.0
    %1745 = vmatpush1.msra.mxu0 0.0
    %1746 = vmatprep.subr.mxu0 0.0
    %1747 = vmatpush1.msra.mxu0 0.0
    %1748 = vmatprep.subr.mxu0 0.0
    %1749 = vmatpush1.msra.mxu0 0.0
    %1750 = vmatprep.subr.mxu0 0.0
    %1751 = vmatpush1.msra.mxu0 0.0
    %1752 = vmatprep.subr.mxu0 0.0
    %1753 = vmatpush1.msra.mxu0 0.0
    %1754 = vmatprep.subr.mxu0 0.0
    %1755 = vmatpush1.msra.mxu0 0.0
    %1756 = vmatprep.subr.mxu0 0.0
    %1757 = vmatpush1.msra.mxu0 0.0
    %1758 = vmatprep.subr.mxu0 0.0
    %1759 = vmatpush1.msra.mxu0 0.0
    %1760 = vmatprep.subr.mxu0 0.0
    %1761 = vmatpush1.msra.mxu0 0.0
    %1762 = vmatprep.subr.mxu0 0.0
    %1763 = vmatpush1.msra.mxu0 0.0
    %1764 = vmatprep.subr.mxu0 0.0
    %1765 = vmatpush1.msra.mxu0 0.0
    %1766 = vmatprep.subr.mxu0 0.0
    %1767 = vmatpush1.msra.mxu0 0.0
    %1768 = vmatprep.subr.mxu0 0.0
    %1769 = vmatpush1.msra.mxu0 0.0
    %1770 = vmatprep.subr.mxu0 0.0
    %1771 = vmatpush1.msra.mxu0 0.0
    %1772 = vmatprep.subr.mxu0 0.0
    %1773 = vmatpush1.msra.mxu0 0.0
    %1774 = vmatprep.subr.mxu0 0.0
    %1775 = vmatpush1.msra.mxu0 0.0
    %1776 = vmatprep.subr.mxu0 0.0
    %1777 = vmatpush1.msra.mxu0 0.0
    %1778 = vmatprep.subr.mxu0 0.0
    %1779 = vmatpush1.msra.mxu0 0.0
    %1780 = vmatprep.subr.mxu0 0.0
    %1781 = vmatpush1.msra.mxu0 0.0
    %1782 = vmatprep.mubr.f32.mxu0 0.0
    %1783 = vmatmul.mubr.f32.gmra.mrb[0].mxu0 %v666
    %v1784 = vpop.f32.mrb[0].mxu0
    %v1785 = vadd.f32 0.0, %v1784
    %v1786 = vpop.f32.mrb[0].mxu0
    %1787 = vdwg.mxu0
    %1788 = vmatprep.subr.mxu0 0.0
    %1789 = vmatpush1.msra.mxu0 %v527
    %1790 = vmatprep.subr.mxu0 0.0
    %1791 = vmatpush1.msra.mxu0 %v532
    %1792 = vmatprep.subr.mxu0 0.0
    %1793 = vmatpush1.msra.mxu0 0.0
    %1794 = vmatprep.subr.mxu0 0.0
    %1795 = vmatpush1.msra.mxu0 0.0
    %1796 = vmatprep.subr.mxu0 0.0
    %1797 = vmatpush1.msra.mxu0 0.0
    %1798 = vmatprep.subr.mxu0 0.0
    %1799 = vmatpush1.msra.mxu0 0.0
    %1800 = vmatprep.subr.mxu0 0.0
    %1801 = vmatpush1.msra.mxu0 0.0
    %1802 = vmatprep.subr.mxu0 0.0
    %1803 = vmatpush1.msra.mxu0 0.0
    %1804 = vmatprep.subr.mxu0 0.0
    %1805 = vmatpush1.msra.mxu0 0.0
    %1806 = vmatprep.subr.mxu0 0.0
    %1807 = vmatpush1.msra.mxu0 0.0
    %1808 = vmatprep.subr.mxu0 0.0
    %1809 = vmatpush1.msra.mxu0 0.0
    %1810 = vmatprep.subr.mxu0 0.0
    %1811 = vmatpush1.msra.mxu0 0.0
    %1812 = vmatprep.subr.mxu0 0.0
    %1813 = vmatpush1.msra.mxu0 0.0
    %1814 = vmatprep.subr.mxu0 0.0
    %1815 = vmatpush1.msra.mxu0 0.0
    %1816 = vmatprep.subr.mxu0 0.0
    %1817 = vmatpush1.msra.mxu0 0.0
    %1818 = vmatprep.subr.mxu0 0.0
    %1819 = vmatpush1.msra.mxu0 0.0
    %1820 = vmatprep.subr.mxu0 0.0
    %1821 = vmatpush1.msra.mxu0 0.0
    %1822 = vmatprep.subr.mxu0 0.0
    %1823 = vmatpush1.msra.mxu0 0.0
    %1824 = vmatprep.subr.mxu0 0.0
    %1825 = vmatpush1.msra.mxu0 0.0
    %1826 = vmatprep.subr.mxu0 0.0
    %1827 = vmatpush1.msra.mxu0 0.0
    %1828 = vmatprep.subr.mxu0 0.0
    %1829 = vmatpush1.msra.mxu0 0.0
    %1830 = vmatprep.subr.mxu0 0.0
    %1831 = vmatpush1.msra.mxu0 0.0
    %1832 = vmatprep.subr.mxu0 0.0
    %1833 = vmatpush1.msra.mxu0 0.0
    %1834 = vmatprep.subr.mxu0 0.0
    %1835 = vmatpush1.msra.mxu0 0.0
    %1836 = vmatprep.subr.mxu0 0.0
    %1837 = vmatpush1.msra.mxu0 0.0
    %1838 = vmatprep.subr.mxu0 0.0
    %1839 = vmatpush1.msra.mxu0 0.0
    %1840 = vmatprep.subr.mxu0 0.0
    %1841 = vmatpush1.msra.mxu0 0.0
    %1842 = vmatprep.subr.mxu0 0.0
    %1843 = vmatpush1.msra.mxu0 0.0
    %1844 = vmatprep.subr.mxu0 0.0
    %1845 = vmatpush1.msra.mxu0 0.0
    %1846 = vmatprep.subr.mxu0 0.0
    %1847 = vmatpush1.msra.mxu0 0.0
    %1848 = vmatprep.subr.mxu0 0.0
    %1849 = vmatpush1.msra.mxu0 0.0
    %1850 = vmatprep.subr.mxu0 0.0
    %1851 = vmatpush1.msra.mxu0 0.0
    %1852 = vmatprep.mubr.f32.mxu0 0.0
    %1853 = vmatmul.mubr.f32.gmra.mrb[0].mxu0 %v666
    %v1854 = vpop.f32.mrb[0].mxu0
    %v1855 = vadd.f32 0.0, %v1854
    %v1856 = vpop.f32.mrb[0].mxu0
    %1857 = vdwg.mxu0
    %1858 = vmatprep.subr.mxu0 0.0
    %1859 = vmatpush1.msra.mxu0 %v537
    %1860 = vmatprep.subr.mxu0 0.0
    %1861 = vmatpush1.msra.mxu0 %v542
    %1862 = vmatprep.subr.mxu0 0.0
    %1863 = vmatpush1.msra.mxu0 0.0
    %1864 = vmatprep.subr.mxu0 0.0
    %1865 = vmatpush1.msra.mxu0 0.0
    %1866 = vmatprep.subr.mxu0 0.0
    %1867 = vmatpush1.msra.mxu0 0.0
    %1868 = vmatprep.subr.mxu0 0.0
    %1869 = vmatpush1.msra.mxu0 0.0
    %1870 = vmatprep.subr.mxu0 0.0
    %1871 = vmatpush1.msra.mxu0 0.0
    %1872 = vmatprep.subr.mxu0 0.0
    %1873 = vmatpush1.msra.mxu0 0.0
    %1874 = vmatprep.subr.mxu0 0.0
    %1875 = vmatpush1.msra.mxu0 0.0
    %1876 = vmatprep.subr.mxu0 0.0
    %1877 = vmatpush1.msra.mxu0 0.0
    %1878 = vmatprep.subr.mxu0 0.0
    %1879 = vmatpush1.msra.mxu0 0.0
    %1880 = vmatprep.subr.mxu0 0.0
    %1881 = vmatpush1.msra.mxu0 0.0
    %1882 = vmatprep.subr.mxu0 0.0
    %1883 = vmatpush1.msra.mxu0 0.0
    %1884 = vmatprep.subr.mxu0 0.0
    %1885 = vmatpush1.msra.mxu0 0.0
    %1886 = vmatprep.subr.mxu0 0.0
    %1887 = vmatpush1.msra.mxu0 0.0
    %1888 = vmatprep.subr.mxu0 0.0
    %1889 = vmatpush1.msra.mxu0 0.0
    %1890 = vmatprep.subr.mxu0 0.0
    %1891 = vmatpush1.msra.mxu0 0.0
    %1892 = vmatprep.subr.mxu0 0.0
    %1893 = vmatpush1.msra.mxu0 0.0
    %1894 = vmatprep.subr.mxu0 0.0
    %1895 = vmatpush1.msra.mxu0 0.0
    %1896 = vmatprep.subr.mxu0 0.0
    %1897 = vmatpush1.msra.mxu0 0.0
    %1898 = vmatprep.subr.mxu0 0.0
    %1899 = vmatpush1.msra.mxu0 0.0
    %1900 = vmatprep.subr.mxu0 0.0
    %1901 = vmatpush1.msra.mxu0 0.0
    %1902 = vmatprep.subr.mxu0 0.0
    %1903 = vmatpush1.msra.mxu0 0.0
    %1904 = vmatprep.subr.mxu0 0.0
    %1905 = vmatpush1.msra.mxu0 0.0
    %1906 = vmatprep.subr.mxu0 0.0
    %1907 = vmatpush1.msra.mxu0 0.0
    %1908 = vmatprep.subr.mxu0 0.0
    %1909 = vmatpush1.msra.mxu0 0.0
    %1910 = vmatprep.subr.mxu0 0.0
    %1911 = vmatpush1.msra.mxu0 0.0
    %1912 = vmatprep.subr.mxu0 0.0
    %1913 = vmatpush1.msra.mxu0 0.0
    %1914 = vmatprep.subr.mxu0 0.0
    %1915 = vmatpush1.msra.mxu0 0.0
    %1916 = vmatprep.subr.mxu0 0.0
    %1917 = vmatpush1.msra.mxu0 0.0
    %1918 = vmatprep.subr.mxu0 0.0
    %1919 = vmatpush1.msra.mxu0 0.0
    %1920 = vmatprep.subr.mxu0 0.0
    %1921 = vmatpush1.msra.mxu0 0.0
    %1922 = vmatprep.mubr.f32.mxu0 0.0
    %1923 = vmatmul.mubr.f32.gmra.mrb[0].mxu0 %v666
    %v1924 = vpop.f32.mrb[0].mxu0
    %v1925 = vadd.f32 0.0, %v1924
    %v1926 = vpop.f32.mrb[0].mxu0
    %1927 = vdwg.mxu0
    %1928 = vmatprep.subr.mxu0 0.0
    %1929 = vmatpush1.msra.mxu0 %v547
    %1930 = vmatprep.subr.mxu0 0.0
    %1931 = vmatpush1.msra.mxu0 %v552
    %1932 = vmatprep.subr.mxu0 0.0
    %1933 = vmatpush1.msra.mxu0 0.0
    %1934 = vmatprep.subr.mxu0 0.0
    %1935 = vmatpush1.msra.mxu0 0.0
    %1936 = vmatprep.subr.mxu0 0.0
    %1937 = vmatpush1.msra.mxu0 0.0
    %1938 = vmatprep.subr.mxu0 0.0
    %1939 = vmatpush1.msra.mxu0 0.0
    %1940 = vmatprep.subr.mxu0 0.0
    %1941 = vmatpush1.msra.mxu0 0.0
    %1942 = vmatprep.subr.mxu0 0.0
    %1943 = vmatpush1.msra.mxu0 0.0
    %1944 = vmatprep.subr.mxu0 0.0
    %1945 = vmatpush1.msra.mxu0 0.0
    %1946 = vmatprep.subr.mxu0 0.0
    %1947 = vmatpush1.msra.mxu0 0.0
    %1948 = vmatprep.subr.mxu0 0.0
    %1949 = vmatpush1.msra.mxu0 0.0
    %1950 = vmatprep.subr.mxu0 0.0
    %1951 = vmatpush1.msra.mxu0 0.0
    %1952 = vmatprep.subr.mxu0 0.0
    %1953 = vmatpush1.msra.mxu0 0.0
    %1954 = vmatprep.subr.mxu0 0.0
    %1955 = vmatpush1.msra.mxu0 0.0
    %1956 = vmatprep.subr.mxu0 0.0
    %1957 = vmatpush1.msra.mxu0 0.0
    %1958 = vmatprep.subr.mxu0 0.0
    %1959 = vmatpush1.msra.mxu0 0.0
    %1960 = vmatprep.subr.mxu0 0.0
    %1961 = vmatpush1.msra.mxu0 0.0
    %1962 = vmatprep.subr.mxu0 0.0
    %1963 = vmatpush1.msra.mxu0 0.0
    %1964 = vmatprep.subr.mxu0 0.0
    %1965 = vmatpush1.msra.mxu0 0.0
    %1966 = vmatprep.subr.mxu0 0.0
    %1967 = vmatpush1.msra.mxu0 0.0
    %1968 = vmatprep.subr.mxu0 0.0
    %1969 = vmatpush1.msra.mxu0 0.0
    %1970 = vmatprep.subr.mxu0 0.0
    %1971 = vmatpush1.msra.mxu0 0.0
    %1972 = vmatprep.subr.mxu0 0.0
    %1973 = vmatpush1.msra.mxu0 0.0
    %1974 = vmatprep.subr.mxu0 0.0
    %1975 = vmatpush1.msra.mxu0 0.0
    %1976 = vmatprep.subr.mxu0 0.0
    %1977 = vmatpush1.msra.mxu0 0.0
    %1978 = vmatprep.subr.mxu0 0.0
    %1979 = vmatpush1.msra.mxu0 0.0
    %1980 = vmatprep.subr.mxu0 0.0
    %1981 = vmatpush1.msra.mxu0 0.0
    %1982 = vmatprep.subr.mxu0 0.0
    %1983 = vmatpush1.msra.mxu0 0.0
    %1984 = vmatprep.subr.mxu0 0.0
    %1985 = vmatpush1.msra.mxu0 0.0
    %1986 = vmatprep.subr.mxu0 0.0
    %1987 = vmatpush1.msra.mxu0 0.0
    %1988 = vmatprep.subr.mxu0 0.0
    %1989 = vmatpush1.msra.mxu0 0.0
    %1990 = vmatprep.subr.mxu0 0.0
    %1991 = vmatpush1.msra.mxu0 0.0
    %1992 = vmatprep.mubr.f32.mxu0 0.0
    %1993 = vmatmul.mubr.f32.gmra.mrb[0].mxu0 %v666
    %v1994 = vpop.f32.mrb[0].mxu0
    %v1995 = vadd.f32 0.0, %v1994
    %v1996 = vpop.f32.mrb[0].mxu0
    %1997 = vdwg.mxu0
    %1998 = vmatprep.subr.mxu0 0.0
    %1999 = vmatpush1.msra.mxu0 %v557
    %2000 = vmatprep.subr.mxu0 0.0
    %2001 = vmatpush1.msra.mxu0 %v562
    %2002 = vmatprep.subr.mxu0 0.0
    %2003 = vmatpush1.msra.mxu0 0.0
    %2004 = vmatprep.subr.mxu0 0.0
    %2005 = vmatpush1.msra.mxu0 0.0
    %2006 = vmatprep.subr.mxu0 0.0
    %2007 = vmatpush1.msra.mxu0 0.0
    %2008 = vmatprep.subr.mxu0 0.0
    %2009 = vmatpush1.msra.mxu0 0.0
    %2010 = vmatprep.subr.mxu0 0.0
    %2011 = vmatpush1.msra.mxu0 0.0
    %2012 = vmatprep.subr.mxu0 0.0
    %2013 = vmatpush1.msra.mxu0 0.0
    %2014 = vmatprep.subr.mxu0 0.0
    %2015 = vmatpush1.msra.mxu0 0.0
    %2016 = vmatprep.subr.mxu0 0.0
    %2017 = vmatpush1.msra.mxu0 0.0
    %2018 = vmatprep.subr.mxu0 0.0
    %2019 = vmatpush1.msra.mxu0 0.0
    %2020 = vmatprep.subr.mxu0 0.0
    %2021 = vmatpush1.msra.mxu0 0.0
    %2022 = vmatprep.subr.mxu0 0.0
    %2023 = vmatpush1.msra.mxu0 0.0
    %2024 = vmatprep.subr.mxu0 0.0
    %2025 = vmatpush1.msra.mxu0 0.0
    %2026 = vmatprep.subr.mxu0 0.0
    %2027 = vmatpush1.msra.mxu0 0.0
    %2028 = vmatprep.subr.mxu0 0.0
    %2029 = vmatpush1.msra.mxu0 0.0
    %2030 = vmatprep.subr.mxu0 0.0
    %2031 = vmatpush1.msra.mxu0 0.0
    %2032 = vmatprep.subr.mxu0 0.0
    %2033 = vmatpush1.msra.mxu0 0.0
    %2034 = vmatprep.subr.mxu0 0.0
    %2035 = vmatpush1.msra.mxu0 0.0
    %2036 = vmatprep.subr.mxu0 0.0
    %2037 = vmatpush1.msra.mxu0 0.0
    %2038 = vmatprep.subr.mxu0 0.0
    %2039 = vmatpush1.msra.mxu0 0.0
    %2040 = vmatprep.subr.mxu0 0.0
    %2041 = vmatpush1.msra.mxu0 0.0
    %2042 = vmatprep.subr.mxu0 0.0
    %2043 = vmatpush1.msra.mxu0 0.0
    %2044 = vmatprep.subr.mxu0 0.0
    %2045 = vmatpush1.msra.mxu0 0.0
    %2046 = vmatprep.subr.mxu0 0.0
    %2047 = vmatpush1.msra.mxu0 0.0
    %2048 = vmatprep.subr.mxu0 0.0
    %2049 = vmatpush1.msra.mxu0 0.0
    %2050 = vmatprep.subr.mxu0 0.0
    %2051 = vmatpush1.msra.mxu0 0.0
    %2052 = vmatprep.subr.mxu0 0.0
    %2053 = vmatpush1.msra.mxu0 0.0
    %2054 = vmatprep.subr.mxu0 0.0
    %2055 = vmatpush1.msra.mxu0 0.0
    %2056 = vmatprep.subr.mxu0 0.0
    %2057 = vmatpush1.msra.mxu0 0.0
    %2058 = vmatprep.subr.mxu0 0.0
    %2059 = vmatpush1.msra.mxu0 0.0
    %2060 = vmatprep.subr.mxu0 0.0
    %2061 = vmatpush1.msra.mxu0 0.0
    %2062 = vmatprep.mubr.f32.mxu0 0.0
    %2063 = vmatmul.mubr.f32.gmra.mrb[0].mxu0 %v666
    %v2064 = vpop.f32.mrb[0].mxu0
    %v2065 = vadd.f32 0.0, %v2064
    %v2066 = vpop.f32.mrb[0].mxu0
    %2067 = vdwg.mxu0
    %2068 = vmatprep.subr.mxu0 0.0
    %2069 = vmatpush1.msra.mxu0 %v567
    %2070 = vmatprep.subr.mxu0 0.0
    %2071 = vmatpush1.msra.mxu0 %v572
    %2072 = vmatprep.subr.mxu0 0.0
    %2073 = vmatpush1.msra.mxu0 0.0
    %2074 = vmatprep.subr.mxu0 0.0
    %2075 = vmatpush1.msra.mxu0 0.0
    %2076 = vmatprep.subr.mxu0 0.0
    %2077 = vmatpush1.msra.mxu0 0.0
    %2078 = vmatprep.subr.mxu0 0.0
    %2079 = vmatpush1.msra.mxu0 0.0
    %2080 = vmatprep.subr.mxu0 0.0
    %2081 = vmatpush1.msra.mxu0 0.0
    %2082 = vmatprep.subr.mxu0 0.0
    %2083 = vmatpush1.msra.mxu0 0.0
    %2084 = vmatprep.subr.mxu0 0.0
    %2085 = vmatpush1.msra.mxu0 0.0
    %2086 = vmatprep.subr.mxu0 0.0
    %2087 = vmatpush1.msra.mxu0 0.0
    %2088 = vmatprep.subr.mxu0 0.0
    %2089 = vmatpush1.msra.mxu0 0.0
    %2090 = vmatprep.subr.mxu0 0.0
    %2091 = vmatpush1.msra.mxu0 0.0
    %2092 = vmatprep.subr.mxu0 0.0
    %2093 = vmatpush1.msra.mxu0 0.0
    %2094 = vmatprep.subr.mxu0 0.0
    %2095 = vmatpush1.msra.mxu0 0.0
    %2096 = vmatprep.subr.mxu0 0.0
    %2097 = vmatpush1.msra.mxu0 0.0
    %2098 = vmatprep.subr.mxu0 0.0
    %2099 = vmatpush1.msra.mxu0 0.0
    %2100 = vmatprep.subr.mxu0 0.0
    %2101 = vmatpush1.msra.mxu0 0.0
    %2102 = vmatprep.subr.mxu0 0.0
    %2103 = vmatpush1.msra.mxu0 0.0
    %2104 = vmatprep.subr.mxu0 0.0
    %2105 = vmatpush1.msra.mxu0 0.0
    %2106 = vmatprep.subr.mxu0 0.0
    %2107 = vmatpush1.msra.mxu0 0.0
    %2108 = vmatprep.subr.mxu0 0.0
    %2109 = vmatpush1.msra.mxu0 0.0
    %2110 = vmatprep.subr.mxu0 0.0
    %2111 = vmatpush1.msra.mxu0 0.0
    %2112 = vmatprep.subr.mxu0 0.0
    %2113 = vmatpush1.msra.mxu0 0.0
    %2114 = vmatprep.subr.mxu0 0.0
    %2115 = vmatpush1.msra.mxu0 0.0
    %2116 = vmatprep.subr.mxu0 0.0
    %2117 = vmatpush1.msra.mxu0 0.0
    %2118 = vmatprep.subr.mxu0 0.0
    %2119 = vmatpush1.msra.mxu0 0.0
    %2120 = vmatprep.subr.mxu0 0.0
    %2121 = vmatpush1.msra.mxu0 0.0
    %2122 = vmatprep.subr.mxu0 0.0
    %2123 = vmatpush1.msra.mxu0 0.0
    %2124 = vmatprep.subr.mxu0 0.0
    %2125 = vmatpush1.msra.mxu0 0.0
    %2126 = vmatprep.subr.mxu0 0.0
    %2127 = vmatpush1.msra.mxu0 0.0
    %2128 = vmatprep.subr.mxu0 0.0
    %2129 = vmatpush1.msra.mxu0 0.0
    %2130 = vmatprep.subr.mxu0 0.0
    %2131 = vmatpush1.msra.mxu0 0.0
    %2132 = vmatprep.mubr.f32.mxu0 0.0
    %2133 = vmatmul.mubr.f32.gmra.mrb[0].mxu0 %v666
    %v2134 = vpop.f32.mrb[0].mxu0
    %v2135 = vadd.f32 0.0, %v2134
    %v2136 = vpop.f32.mrb[0].mxu0
    %2137 = vdwg.mxu0
    %2138 = vmatprep.subr.mxu0 0.0
    %2139 = vmatpush1.msra.mxu0 %v577
    %2140 = vmatprep.subr.mxu0 0.0
    %2141 = vmatpush1.msra.mxu0 %v582
    %2142 = vmatprep.subr.mxu0 0.0
    %2143 = vmatpush1.msra.mxu0 0.0
    %2144 = vmatprep.subr.mxu0 0.0
    %2145 = vmatpush1.msra.mxu0 0.0
    %2146 = vmatprep.subr.mxu0 0.0
    %2147 = vmatpush1.msra.mxu0 0.0
    %2148 = vmatprep.subr.mxu0 0.0
    %2149 = vmatpush1.msra.mxu0 0.0
    %2150 = vmatprep.subr.mxu0 0.0
    %2151 = vmatpush1.msra.mxu0 0.0
    %2152 = vmatprep.subr.mxu0 0.0
    %2153 = vmatpush1.msra.mxu0 0.0
    %2154 = vmatprep.subr.mxu0 0.0
    %2155 = vmatpush1.msra.mxu0 0.0
    %2156 = vmatprep.subr.mxu0 0.0
    %2157 = vmatpush1.msra.mxu0 0.0
    %2158 = vmatprep.subr.mxu0 0.0
    %2159 = vmatpush1.msra.mxu0 0.0
    %2160 = vmatprep.subr.mxu0 0.0
    %2161 = vmatpush1.msra.mxu0 0.0
    %2162 = vmatprep.subr.mxu0 0.0
    %2163 = vmatpush1.msra.mxu0 0.0
    %2164 = vmatprep.subr.mxu0 0.0
    %2165 = vmatpush1.msra.mxu0 0.0
    %2166 = vmatprep.subr.mxu0 0.0
    %2167 = vmatpush1.msra.mxu0 0.0
    %2168 = vmatprep.subr.mxu0 0.0
    %2169 = vmatpush1.msra.mxu0 0.0
    %2170 = vmatprep.subr.mxu0 0.0
    %2171 = vmatpush1.msra.mxu0 0.0
    %2172 = vmatprep.subr.mxu0 0.0
    %2173 = vmatpush1.msra.mxu0 0.0
    %2174 = vmatprep.subr.mxu0 0.0
    %2175 = vmatpush1.msra.mxu0 0.0
    %2176 = vmatprep.subr.mxu0 0.0
    %2177 = vmatpush1.msra.mxu0 0.0
    %2178 = vmatprep.subr.mxu0 0.0
    %2179 = vmatpush1.msra.mxu0 0.0
    %2180 = vmatprep.subr.mxu0 0.0
    %2181 = vmatpush1.msra.mxu0 0.0
    %2182 = vmatprep.subr.mxu0 0.0
    %2183 = vmatpush1.msra.mxu0 0.0
    %2184 = vmatprep.subr.mxu0 0.0
    %2185 = vmatpush1.msra.mxu0 0.0
    %2186 = vmatprep.subr.mxu0 0.0
    %2187 = vmatpush1.msra.mxu0 0.0
    %2188 = vmatprep.subr.mxu0 0.0
    %2189 = vmatpush1.msra.mxu0 0.0
    %2190 = vmatprep.subr.mxu0 0.0
    %2191 = vmatpush1.msra.mxu0 0.0
    %2192 = vmatprep.subr.mxu0 0.0
    %2193 = vmatpush1.msra.mxu0 0.0
    %2194 = vmatprep.subr.mxu0 0.0
    %2195 = vmatpush1.msra.mxu0 0.0
    %2196 = vmatprep.subr.mxu0 0.0
    %2197 = vmatpush1.msra.mxu0 0.0
    %2198 = vmatprep.subr.mxu0 0.0
    %2199 = vmatpush1.msra.mxu0 0.0
    %2200 = vmatprep.subr.mxu0 0.0
    %2201 = vmatpush1.msra.mxu0 0.0
    %2202 = vmatprep.mubr.f32.mxu0 0.0
    %2203 = vmatmul.mubr.f32.gmra.mrb[0].mxu0 %v666
    %v2204 = vpop.f32.mrb[0].mxu0
    %v2205 = vadd.f32 0.0, %v2204
    %v2206 = vpop.f32.mrb[0].mxu0
    %2207 = vdwg.mxu0
    %2208 = vmatprep.subr.mxu0 0.0
    %2209 = vmatpush1.msra.mxu0 %v587
    %2210 = vmatprep.subr.mxu0 0.0
    %2211 = vmatpush1.msra.mxu0 %v592
    %2212 = vmatprep.subr.mxu0 0.0
    %2213 = vmatpush1.msra.mxu0 0.0
    %2214 = vmatprep.subr.mxu0 0.0
    %2215 = vmatpush1.msra.mxu0 0.0
    %2216 = vmatprep.subr.mxu0 0.0
    %2217 = vmatpush1.msra.mxu0 0.0
    %2218 = vmatprep.subr.mxu0 0.0
    %2219 = vmatpush1.msra.mxu0 0.0
    %2220 = vmatprep.subr.mxu0 0.0
    %2221 = vmatpush1.msra.mxu0 0.0
    %2222 = vmatprep.subr.mxu0 0.0
    %2223 = vmatpush1.msra.mxu0 0.0
    %2224 = vmatprep.subr.mxu0 0.0
    %2225 = vmatpush1.msra.mxu0 0.0
    %2226 = vmatprep.subr.mxu0 0.0
    %2227 = vmatpush1.msra.mxu0 0.0
    %2228 = vmatprep.subr.mxu0 0.0
    %2229 = vmatpush1.msra.mxu0 0.0
    %2230 = vmatprep.subr.mxu0 0.0
    %2231 = vmatpush1.msra.mxu0 0.0
    %2232 = vmatprep.subr.mxu0 0.0
    %2233 = vmatpush1.msra.mxu0 0.0
    %2234 = vmatprep.subr.mxu0 0.0
    %2235 = vmatpush1.msra.mxu0 0.0
    %2236 = vmatprep.subr.mxu0 0.0
    %2237 = vmatpush1.msra.mxu0 0.0
    %2238 = vmatprep.subr.mxu0 0.0
    %2239 = vmatpush1.msra.mxu0 0.0
    %2240 = vmatprep.subr.mxu0 0.0
    %2241 = vmatpush1.msra.mxu0 0.0
    %2242 = vmatprep.subr.mxu0 0.0
    %2243 = vmatpush1.msra.mxu0 0.0
    %2244 = vmatprep.subr.mxu0 0.0
    %2245 = vmatpush1.msra.mxu0 0.0
    %2246 = vmatprep.subr.mxu0 0.0
    %2247 = vmatpush1.msra.mxu0 0.0
    %2248 = vmatprep.subr.mxu0 0.0
    %2249 = vmatpush1.msra.mxu0 0.0
    %2250 = vmatprep.subr.mxu0 0.0
    %2251 = vmatpush1.msra.mxu0 0.0
    %2252 = vmatprep.subr.mxu0 0.0
    %2253 = vmatpush1.msra.mxu0 0.0
    %2254 = vmatprep.subr.mxu0 0.0
    %2255 = vmatpush1.msra.mxu0 0.0
    %2256 = vmatprep.subr.mxu0 0.0
    %2257 = vmatpush1.msra.mxu0 0.0
    %2258 = vmatprep.subr.mxu0 0.0
    %2259 = vmatpush1.msra.mxu0 0.0
    %2260 = vmatprep.subr.mxu0 0.0
    %2261 = vmatpush1.msra.mxu0 0.0
    %2262 = vmatprep.subr.mxu0 0.0
    %2263 = vmatpush1.msra.mxu0 0.0
    %2264 = vmatprep.subr.mxu0 0.0
    %2265 = vmatpush1.msra.mxu0 0.0
    %2266 = vmatprep.subr.mxu0 0.0
    %2267 = vmatpush1.msra.mxu0 0.0
    %2268 = vmatprep.subr.mxu0 0.0
    %2269 = vmatpush1.msra.mxu0 0.0
    %2270 = vmatprep.subr.mxu0 0.0
    %2271 = vmatpush1.msra.mxu0 0.0
    %2272 = vmatprep.mubr.f32.mxu0 0.0
    %2273 = vmatmul.mubr.f32.gmra.mrb[0].mxu0 %v666
    %v2274 = vpop.f32.mrb[0].mxu0
    %v2275 = vadd.f32 0.0, %v2274
    %v2276 = vpop.f32.mrb[0].mxu0
    %2277 = vdwg.mxu0
    %2278 = vmatprep.subr.mxu0 0.0
    %2279 = vmatpush1.msra.mxu0 %v597
    %2280 = vmatprep.subr.mxu0 0.0
    %2281 = vmatpush1.msra.mxu0 %v602
    %2282 = vmatprep.subr.mxu0 0.0
    %2283 = vmatpush1.msra.mxu0 0.0
    %2284 = vmatprep.subr.mxu0 0.0
    %2285 = vmatpush1.msra.mxu0 0.0
    %2286 = vmatprep.subr.mxu0 0.0
    %2287 = vmatpush1.msra.mxu0 0.0
    %2288 = vmatprep.subr.mxu0 0.0
    %2289 = vmatpush1.msra.mxu0 0.0
    %2290 = vmatprep.subr.mxu0 0.0
    %2291 = vmatpush1.msra.mxu0 0.0
    %2292 = vmatprep.subr.mxu0 0.0
    %2293 = vmatpush1.msra.mxu0 0.0
    %2294 = vmatprep.subr.mxu0 0.0
    %2295 = vmatpush1.msra.mxu0 0.0
    %2296 = vmatprep.subr.mxu0 0.0
    %2297 = vmatpush1.msra.mxu0 0.0
    %2298 = vmatprep.subr.mxu0 0.0
    %2299 = vmatpush1.msra.mxu0 0.0
    %2300 = vmatprep.subr.mxu0 0.0
    %2301 = vmatpush1.msra.mxu0 0.0
    %2302 = vmatprep.subr.mxu0 0.0
    %2303 = vmatpush1.msra.mxu0 0.0
    %2304 = vmatprep.subr.mxu0 0.0
    %2305 = vmatpush1.msra.mxu0 0.0
    %2306 = vmatprep.subr.mxu0 0.0
    %2307 = vmatpush1.msra.mxu0 0.0
    %2308 = vmatprep.subr.mxu0 0.0
    %2309 = vmatpush1.msra.mxu0 0.0
    %2310 = vmatprep.subr.mxu0 0.0
    %2311 = vmatpush1.msra.mxu0 0.0
    %2312 = vmatprep.subr.mxu0 0.0
    %2313 = vmatpush1.msra.mxu0 0.0
    %2314 = vmatprep.subr.mxu0 0.0
    %2315 = vmatpush1.msra.mxu0 0.0
    %2316 = vmatprep.subr.mxu0 0.0
    %2317 = vmatpush1.msra.mxu0 0.0
    %2318 = vmatprep.subr.mxu0 0.0
    %2319 = vmatpush1.msra.mxu0 0.0
    %2320 = vmatprep.subr.mxu0 0.0
    %2321 = vmatpush1.msra.mxu0 0.0
    %2322 = vmatprep.subr.mxu0 0.0
    %2323 = vmatpush1.msra.mxu0 0.0
    %2324 = vmatprep.subr.mxu0 0.0
    %2325 = vmatpush1.msra.mxu0 0.0
    %2326 = vmatprep.subr.mxu0 0.0
    %2327 = vmatpush1.msra.mxu0 0.0
    %2328 = vmatprep.subr.mxu0 0.0
    %2329 = vmatpush1.msra.mxu0 0.0
    %2330 = vmatprep.subr.mxu0 0.0
    %2331 = vmatpush1.msra.mxu0 0.0
    %2332 = vmatprep.subr.mxu0 0.0
    %2333 = vmatpush1.msra.mxu0 0.0
    %2334 = vmatprep.subr.mxu0 0.0
    %2335 = vmatpush1.msra.mxu0 0.0
    %2336 = vmatprep.subr.mxu0 0.0
    %2337 = vmatpush1.msra.mxu0 0.0
    %2338 = vmatprep.subr.mxu0 0.0
    %2339 = vmatpush1.msra.mxu0 0.0
    %2340 = vmatprep.subr.mxu0 0.0
    %2341 = vmatpush1.msra.mxu0 0.0
    %2342 = vmatprep.mubr.f32.mxu0 0.0
    %2343 = vmatmul.mubr.f32.gmra.mrb[0].mxu0 %v666
    %v2344 = vpop.f32.mrb[0].mxu0
    %v2345 = vadd.f32 0.0, %v2344
    %v2346 = vpop.f32.mrb[0].mxu0
    %2347 = vdwg.mxu0
    %2348 = vmatprep.subr.mxu0 0.0
    %2349 = vmatpush1.msra.mxu0 %v607
    %2350 = vmatprep.subr.mxu0 0.0
    %2351 = vmatpush1.msra.mxu0 %v612
    %2352 = vmatprep.subr.mxu0 0.0
    %2353 = vmatpush1.msra.mxu0 0.0
    %2354 = vmatprep.subr.mxu0 0.0
    %2355 = vmatpush1.msra.mxu0 0.0
    %2356 = vmatprep.subr.mxu0 0.0
    %2357 = vmatpush1.msra.mxu0 0.0
    %2358 = vmatprep.subr.mxu0 0.0
    %2359 = vmatpush1.msra.mxu0 0.0
    %2360 = vmatprep.subr.mxu0 0.0
    %2361 = vmatpush1.msra.mxu0 0.0
    %2362 = vmatprep.subr.mxu0 0.0
    %2363 = vmatpush1.msra.mxu0 0.0
    %2364 = vmatprep.subr.mxu0 0.0
    %2365 = vmatpush1.msra.mxu0 0.0
    %2366 = vmatprep.subr.mxu0 0.0
    %2367 = vmatpush1.msra.mxu0 0.0
    %2368 = vmatprep.subr.mxu0 0.0
    %2369 = vmatpush1.msra.mxu0 0.0
    %2370 = vmatprep.subr.mxu0 0.0
    %2371 = vmatpush1.msra.mxu0 0.0
    %2372 = vmatprep.subr.mxu0 0.0
    %2373 = vmatpush1.msra.mxu0 0.0
    %2374 = vmatprep.subr.mxu0 0.0
    %2375 = vmatpush1.msra.mxu0 0.0
    %2376 = vmatprep.subr.mxu0 0.0
    %2377 = vmatpush1.msra.mxu0 0.0
    %2378 = vmatprep.subr.mxu0 0.0
    %2379 = vmatpush1.msra.mxu0 0.0
    %2380 = vmatprep.subr.mxu0 0.0
    %2381 = vmatpush1.msra.mxu0 0.0
    %2382 = vmatprep.subr.mxu0 0.0
    %2383 = vmatpush1.msra.mxu0 0.0
    %2384 = vmatprep.subr.mxu0 0.0
    %2385 = vmatpush1.msra.mxu0 0.0
    %2386 = vmatprep.subr.mxu0 0.0
    %2387 = vmatpush1.msra.mxu0 0.0
    %2388 = vmatprep.subr.mxu0 0.0
    %2389 = vmatpush1.msra.mxu0 0.0
    %2390 = vmatprep.subr.mxu0 0.0
    %2391 = vmatpush1.msra.mxu0 0.0
    %2392 = vmatprep.subr.mxu0 0.0
    %2393 = vmatpush1.msra.mxu0 0.0
    %2394 = vmatprep.subr.mxu0 0.0
    %2395 = vmatpush1.msra.mxu0 0.0
    %2396 = vmatprep.subr.mxu0 0.0
    %2397 = vmatpush1.msra.mxu0 0.0
    %2398 = vmatprep.subr.mxu0 0.0
    %2399 = vmatpush1.msra.mxu0 0.0
    %2400 = vmatprep.subr.mxu0 0.0
    %2401 = vmatpush1.msra.mxu0 0.0
    %2402 = vmatprep.subr.mxu0 0.0
    %2403 = vmatpush1.msra.mxu0 0.0
    %2404 = vmatprep.subr.mxu0 0.0
    %2405 = vmatpush1.msra.mxu0 0.0
    %2406 = vmatprep.subr.mxu0 0.0
    %2407 = vmatpush1.msra.mxu0 0.0
    %2408 = vmatprep.subr.mxu0 0.0
    %2409 = vmatpush1.msra.mxu0 0.0
    %2410 = vmatprep.subr.mxu0 0.0
    %2411 = vmatpush1.msra.mxu0 0.0
    %2412 = vmatprep.mubr.f32.mxu0 0.0
    %2413 = vmatmul.mubr.f32.gmra.mrb[0].mxu0 %v666
    %v2414 = vpop.f32.mrb[0].mxu0
    %v2415 = vadd.f32 0.0, %v2414
    %v2416 = vpop.f32.mrb[0].mxu0
    %2417 = vdwg.mxu0
    %2418 = vmatprep.subr.mxu0 0.0
    %2419 = vmatpush1.msra.mxu0 %v617
    %2420 = vmatprep.subr.mxu0 0.0
    %2421 = vmatpush1.msra.mxu0 %v622
    %2422 = vmatprep.subr.mxu0 0.0
    %2423 = vmatpush1.msra.mxu0 0.0
    %2424 = vmatprep.subr.mxu0 0.0
    %2425 = vmatpush1.msra.mxu0 0.0
    %2426 = vmatprep.subr.mxu0 0.0
    %2427 = vmatpush1.msra.mxu0 0.0
    %2428 = vmatprep.subr.mxu0 0.0
    %2429 = vmatpush1.msra.mxu0 0.0
    %2430 = vmatprep.subr.mxu0 0.0
    %2431 = vmatpush1.msra.mxu0 0.0
    %2432 = vmatprep.subr.mxu0 0.0
    %2433 = vmatpush1.msra.mxu0 0.0
    %2434 = vmatprep.subr.mxu0 0.0
    %2435 = vmatpush1.msra.mxu0 0.0
    %2436 = vmatprep.subr.mxu0 0.0
    %2437 = vmatpush1.msra.mxu0 0.0
    %2438 = vmatprep.subr.mxu0 0.0
    %2439 = vmatpush1.msra.mxu0 0.0
    %2440 = vmatprep.subr.mxu0 0.0
    %2441 = vmatpush1.msra.mxu0 0.0
    %2442 = vmatprep.subr.mxu0 0.0
    %2443 = vmatpush1.msra.mxu0 0.0
    %2444 = vmatprep.subr.mxu0 0.0
    %2445 = vmatpush1.msra.mxu0 0.0
    %2446 = vmatprep.subr.mxu0 0.0
    %2447 = vmatpush1.msra.mxu0 0.0
    %2448 = vmatprep.subr.mxu0 0.0
    %2449 = vmatpush1.msra.mxu0 0.0
    %2450 = vmatprep.subr.mxu0 0.0
    %2451 = vmatpush1.msra.mxu0 0.0
    %2452 = vmatprep.subr.mxu0 0.0
    %2453 = vmatpush1.msra.mxu0 0.0
    %2454 = vmatprep.subr.mxu0 0.0
    %2455 = vmatpush1.msra.mxu0 0.0
    %2456 = vmatprep.subr.mxu0 0.0
    %2457 = vmatpush1.msra.mxu0 0.0
    %2458 = vmatprep.subr.mxu0 0.0
    %2459 = vmatpush1.msra.mxu0 0.0
    %2460 = vmatprep.subr.mxu0 0.0
    %2461 = vmatpush1.msra.mxu0 0.0
    %2462 = vmatprep.subr.mxu0 0.0
    %2463 = vmatpush1.msra.mxu0 0.0
    %2464 = vmatprep.subr.mxu0 0.0
    %2465 = vmatpush1.msra.mxu0 0.0
    %2466 = vmatprep.subr.mxu0 0.0
    %2467 = vmatpush1.msra.mxu0 0.0
    %2468 = vmatprep.subr.mxu0 0.0
    %2469 = vmatpush1.msra.mxu0 0.0
    %2470 = vmatprep.subr.mxu0 0.0
    %2471 = vmatpush1.msra.mxu0 0.0
    %2472 = vmatprep.subr.mxu0 0.0
    %2473 = vmatpush1.msra.mxu0 0.0
    %2474 = vmatprep.subr.mxu0 0.0
    %2475 = vmatpush1.msra.mxu0 0.0
    %2476 = vmatprep.subr.mxu0 0.0
    %2477 = vmatpush1.msra.mxu0 0.0
    %2478 = vmatprep.subr.mxu0 0.0
    %2479 = vmatpush1.msra.mxu0 0.0
    %2480 = vmatprep.subr.mxu0 0.0
    %2481 = vmatpush1.msra.mxu0 0.0
    %2482 = vmatprep.mubr.f32.mxu0 0.0
    %2483 = vmatmul.mubr.f32.gmra.mrb[0].mxu0 %v666
    %v2484 = vpop.f32.mrb[0].mxu0
    %v2485 = vadd.f32 0.0, %v2484
    %v2486 = vpop.f32.mrb[0].mxu0
    %2487 = vdwg.mxu0
    %2488 = vmatprep.subr.mxu0 0.0
    %2489 = vmatpush1.msra.mxu0 %v627
    %2490 = vmatprep.subr.mxu0 0.0
    %2491 = vmatpush1.msra.mxu0 %v632
    %2492 = vmatprep.subr.mxu0 0.0
    %2493 = vmatpush1.msra.mxu0 0.0
    %2494 = vmatprep.subr.mxu0 0.0
    %2495 = vmatpush1.msra.mxu0 0.0
    %2496 = vmatprep.subr.mxu0 0.0
    %2497 = vmatpush1.msra.mxu0 0.0
    %2498 = vmatprep.subr.mxu0 0.0
    %2499 = vmatpush1.msra.mxu0 0.0
    %2500 = vmatprep.subr.mxu0 0.0
    %2501 = vmatpush1.msra.mxu0 0.0
    %2502 = vmatprep.subr.mxu0 0.0
    %2503 = vmatpush1.msra.mxu0 0.0
    %2504 = vmatprep.subr.mxu0 0.0
    %2505 = vmatpush1.msra.mxu0 0.0
    %2506 = vmatprep.subr.mxu0 0.0
    %2507 = vmatpush1.msra.mxu0 0.0
    %2508 = vmatprep.subr.mxu0 0.0
    %2509 = vmatpush1.msra.mxu0 0.0
    %2510 = vmatprep.subr.mxu0 0.0
    %2511 = vmatpush1.msra.mxu0 0.0
    %2512 = vmatprep.subr.mxu0 0.0
    %2513 = vmatpush1.msra.mxu0 0.0
    %2514 = vmatprep.subr.mxu0 0.0
    %2515 = vmatpush1.msra.mxu0 0.0
    %2516 = vmatprep.subr.mxu0 0.0
    %2517 = vmatpush1.msra.mxu0 0.0
    %2518 = vmatprep.subr.mxu0 0.0
    %2519 = vmatpush1.msra.mxu0 0.0
    %2520 = vmatprep.subr.mxu0 0.0
    %2521 = vmatpush1.msra.mxu0 0.0
    %2522 = vmatprep.subr.mxu0 0.0
    %2523 = vmatpush1.msra.mxu0 0.0
    %2524 = vmatprep.subr.mxu0 0.0
    %2525 = vmatpush1.msra.mxu0 0.0
    %2526 = vmatprep.subr.mxu0 0.0
    %2527 = vmatpush1.msra.mxu0 0.0
    %2528 = vmatprep.subr.mxu0 0.0
    %2529 = vmatpush1.msra.mxu0 0.0
    %2530 = vmatprep.subr.mxu0 0.0
    %2531 = vmatpush1.msra.mxu0 0.0
    %2532 = vmatprep.subr.mxu0 0.0
    %2533 = vmatpush1.msra.mxu0 0.0
    %2534 = vmatprep.subr.mxu0 0.0
    %2535 = vmatpush1.msra.mxu0 0.0
    %2536 = vmatprep.subr.mxu0 0.0
    %2537 = vmatpush1.msra.mxu0 0.0
    %2538 = vmatprep.subr.mxu0 0.0
    %2539 = vmatpush1.msra.mxu0 0.0
    %2540 = vmatprep.subr.mxu0 0.0
    %2541 = vmatpush1.msra.mxu0 0.0
    %2542 = vmatprep.subr.mxu0 0.0
    %2543 = vmatpush1.msra.mxu0 0.0
    %2544 = vmatprep.subr.mxu0 0.0
    %2545 = vmatpush1.msra.mxu0 0.0
    %2546 = vmatprep.subr.mxu0 0.0
    %2547 = vmatpush1.msra.mxu0 0.0
    %2548 = vmatprep.subr.mxu0 0.0
    %2549 = vmatpush1.msra.mxu0 0.0
    %2550 = vmatprep.subr.mxu0 0.0
    %2551 = vmatpush1.msra.mxu0 0.0
    %2552 = vmatprep.mubr.f32.mxu0 0.0
    %2553 = vmatmul.mubr.f32.gmra.mrb[0].mxu0 %v666
    %v2554 = vpop.f32.mrb[0].mxu0
    %v2555 = vadd.f32 0.0, %v2554
    %v2556 = vpop.f32.mrb[0].mxu0
    %2557 = vdwg.mxu0
    %2558 = vmatprep.subr.mxu0 0.0
    %2559 = vmatpush1.msra.mxu0 %v637
    %2560 = vmatprep.subr.mxu0 0.0
    %2561 = vmatpush1.msra.mxu0 %v642
    %2562 = vmatprep.subr.mxu0 0.0
    %2563 = vmatpush1.msra.mxu0 0.0
    %2564 = vmatprep.subr.mxu0 0.0
    %2565 = vmatpush1.msra.mxu0 0.0
    %2566 = vmatprep.subr.mxu0 0.0
    %2567 = vmatpush1.msra.mxu0 0.0
    %2568 = vmatprep.subr.mxu0 0.0
    %2569 = vmatpush1.msra.mxu0 0.0
    %2570 = vmatprep.subr.mxu0 0.0
    %2571 = vmatpush1.msra.mxu0 0.0
    %2572 = vmatprep.subr.mxu0 0.0
    %2573 = vmatpush1.msra.mxu0 0.0
    %2574 = vmatprep.subr.mxu0 0.0
    %2575 = vmatpush1.msra.mxu0 0.0
    %2576 = vmatprep.subr.mxu0 0.0
    %2577 = vmatpush1.msra.mxu0 0.0
    %2578 = vmatprep.subr.mxu0 0.0
    %2579 = vmatpush1.msra.mxu0 0.0
    %2580 = vmatprep.subr.mxu0 0.0
    %2581 = vmatpush1.msra.mxu0 0.0
    %2582 = vmatprep.subr.mxu0 0.0
    %2583 = vmatpush1.msra.mxu0 0.0
    %2584 = vmatprep.subr.mxu0 0.0
    %2585 = vmatpush1.msra.mxu0 0.0
    %2586 = vmatprep.subr.mxu0 0.0
    %2587 = vmatpush1.msra.mxu0 0.0
    %2588 = vmatprep.subr.mxu0 0.0
    %2589 = vmatpush1.msra.mxu0 0.0
    %2590 = vmatprep.subr.mxu0 0.0
    %2591 = vmatpush1.msra.mxu0 0.0
    %2592 = vmatprep.subr.mxu0 0.0
    %2593 = vmatpush1.msra.mxu0 0.0
    %2594 = vmatprep.subr.mxu0 0.0
    %2595 = vmatpush1.msra.mxu0 0.0
    %2596 = vmatprep.subr.mxu0 0.0
    %2597 = vmatpush1.msra.mxu0 0.0
    %2598 = vmatprep.subr.mxu0 0.0
    %2599 = vmatpush1.msra.mxu0 0.0
    %2600 = vmatprep.subr.mxu0 0.0
    %2601 = vmatpush1.msra.mxu0 0.0
    %2602 = vmatprep.subr.mxu0 0.0
    %2603 = vmatpush1.msra.mxu0 0.0
    %2604 = vmatprep.subr.mxu0 0.0
    %2605 = vmatpush1.msra.mxu0 0.0
    %2606 = vmatprep.subr.mxu0 0.0
    %2607 = vmatpush1.msra.mxu0 0.0
    %2608 = vmatprep.subr.mxu0 0.0
    %2609 = vmatpush1.msra.mxu0 0.0
    %2610 = vmatprep.subr.mxu0 0.0
    %2611 = vmatpush1.msra.mxu0 0.0
    %2612 = vmatprep.subr.mxu0 0.0
    %2613 = vmatpush1.msra.mxu0 0.0
    %2614 = vmatprep.subr.mxu0 0.0
    %2615 = vmatpush1.msra.mxu0 0.0
    %2616 = vmatprep.subr.mxu0 0.0
    %2617 = vmatpush1.msra.mxu0 0.0
    %2618 = vmatprep.subr.mxu0 0.0
    %2619 = vmatpush1.msra.mxu0 0.0
    %2620 = vmatprep.subr.mxu0 0.0
    %2621 = vmatpush1.msra.mxu0 0.0
    %2622 = vmatprep.mubr.f32.mxu0 0.0
    %2623 = vmatmul.mubr.f32.gmra.mrb[0].mxu0 %v666
    %v2624 = vpop.f32.mrb[0].mxu0
    %v2625 = vadd.f32 0.0, %v2624
    %v2626 = vpop.f32.mrb[0].mxu0
    %2627 = vdwg.mxu0
    %2628 = vmatprep.subr.mxu0 0.0
    %2629 = vmatpush1.msra.mxu0 %v647
    %2630 = vmatprep.subr.mxu0 0.0
    %2631 = vmatpush1.msra.mxu0 %v652
    %2632 = vmatprep.subr.mxu0 0.0
    %2633 = vmatpush1.msra.mxu0 0.0
    %2634 = vmatprep.subr.mxu0 0.0
    %2635 = vmatpush1.msra.mxu0 0.0
    %2636 = vmatprep.subr.mxu0 0.0
    %2637 = vmatpush1.msra.mxu0 0.0
    %2638 = vmatprep.subr.mxu0 0.0
    %2639 = vmatpush1.msra.mxu0 0.0
    %2640 = vmatprep.subr.mxu0 0.0
    %2641 = vmatpush1.msra.mxu0 0.0
    %2642 = vmatprep.subr.mxu0 0.0
    %2643 = vmatpush1.msra.mxu0 0.0
    %2644 = vmatprep.subr.mxu0 0.0
    %2645 = vmatpush1.msra.mxu0 0.0
    %2646 = vmatprep.subr.mxu0 0.0
    %2647 = vmatpush1.msra.mxu0 0.0
    %2648 = vmatprep.subr.mxu0 0.0
    %2649 = vmatpush1.msra.mxu0 0.0
    %2650 = vmatprep.subr.mxu0 0.0
    %2651 = vmatpush1.msra.mxu0 0.0
    %2652 = vmatprep.subr.mxu0 0.0
    %2653 = vmatpush1.msra.mxu0 0.0
    %2654 = vmatprep.subr.mxu0 0.0
    %2655 = vmatpush1.msra.mxu0 0.0
    %2656 = vmatprep.subr.mxu0 0.0
    %2657 = vmatpush1.msra.mxu0 0.0
    %2658 = vmatprep.subr.mxu0 0.0
    %2659 = vmatpush1.msra.mxu0 0.0
    %2660 = vmatprep.subr.mxu0 0.0
    %2661 = vmatpush1.msra.mxu0 0.0
    %2662 = vmatprep.subr.mxu0 0.0
    %2663 = vmatpush1.msra.mxu0 0.0
    %2664 = vmatprep.subr.mxu0 0.0
    %2665 = vmatpush1.msra.mxu0 0.0
    %2666 = vmatprep.subr.mxu0 0.0
    %2667 = vmatpush1.msra.mxu0 0.0
    %2668 = vmatprep.subr.mxu0 0.0
    %2669 = vmatpush1.msra.mxu0 0.0
    %2670 = vmatprep.subr.mxu0 0.0
    %2671 = vmatpush1.msra.mxu0 0.0
    %2672 = vmatprep.subr.mxu0 0.0
    %2673 = vmatpush1.msra.mxu0 0.0
    %2674 = vmatprep.subr.mxu0 0.0
    %2675 = vmatpush1.msra.mxu0 0.0
    %2676 = vmatprep.subr.mxu0 0.0
    %2677 = vmatpush1.msra.mxu0 0.0
    %2678 = vmatprep.subr.mxu0 0.0
    %2679 = vmatpush1.msra.mxu0 0.0
    %2680 = vmatprep.subr.mxu0 0.0
    %2681 = vmatpush1.msra.mxu0 0.0
    %2682 = vmatprep.subr.mxu0 0.0
    %2683 = vmatpush1.msra.mxu0 0.0
    %2684 = vmatprep.subr.mxu0 0.0
    %2685 = vmatpush1.msra.mxu0 0.0
    %2686 = vmatprep.subr.mxu0 0.0
    %2687 = vmatpush1.msra.mxu0 0.0
    %2688 = vmatprep.subr.mxu0 0.0
    %2689 = vmatpush1.msra.mxu0 0.0
    %2690 = vmatprep.subr.mxu0 0.0
    %2691 = vmatpush1.msra.mxu0 0.0
    %2692 = vmatprep.mubr.f32.mxu0 0.0
    %2693 = vmatmul.mubr.f32.gmra.mrb[0].mxu0 %v666
    %v2694 = vpop.f32.mrb[0].mxu0
    %v2695 = vadd.f32 0.0, %v2694
    %v2696 = vpop.f32.mrb[0].mxu0
    %2697 = vdwg.mxu0
    %2698 = vmatprep.subr.mxu0 0.0
    %2699 = vmatpush1.msra.mxu0 %v657
    %2700 = vmatprep.subr.mxu0 0.0
    %2701 = vmatpush1.msra.mxu0 %v662
    %2702 = vmatprep.subr.mxu0 0.0
    %2703 = vmatpush1.msra.mxu0 0.0
    %2704 = vmatprep.subr.mxu0 0.0
    %2705 = vmatpush1.msra.mxu0 0.0
    %2706 = vmatprep.subr.mxu0 0.0
    %2707 = vmatpush1.msra.mxu0 0.0
    %2708 = vmatprep.subr.mxu0 0.0
    %2709 = vmatpush1.msra.mxu0 0.0
    %2710 = vmatprep.subr.mxu0 0.0
    %2711 = vmatpush1.msra.mxu0 0.0
    %2712 = vmatprep.subr.mxu0 0.0
    %2713 = vmatpush1.msra.mxu0 0.0
    %2714 = vmatprep.subr.mxu0 0.0
    %2715 = vmatpush1.msra.mxu0 0.0
    %2716 = vmatprep.subr.mxu0 0.0
    %2717 = vmatpush1.msra.mxu0 0.0
    %2718 = vmatprep.subr.mxu0 0.0
    %2719 = vmatpush1.msra.mxu0 0.0
    %2720 = vmatprep.subr.mxu0 0.0
    %2721 = vmatpush1.msra.mxu0 0.0
    %2722 = vmatprep.subr.mxu0 0.0
    %2723 = vmatpush1.msra.mxu0 0.0
    %2724 = vmatprep.subr.mxu0 0.0
    %2725 = vmatpush1.msra.mxu0 0.0
    %2726 = vmatprep.subr.mxu0 0.0
    %2727 = vmatpush1.msra.mxu0 0.0
    %2728 = vmatprep.subr.mxu0 0.0
    %2729 = vmatpush1.msra.mxu0 0.0
    %2730 = vmatprep.subr.mxu0 0.0
    %2731 = vmatpush1.msra.mxu0 0.0
    %2732 = vmatprep.subr.mxu0 0.0
    %2733 = vmatpush1.msra.mxu0 0.0
    %2734 = vmatprep.subr.mxu0 0.0
    %2735 = vmatpush1.msra.mxu0 0.0
    %2736 = vmatprep.subr.mxu0 0.0
    %2737 = vmatpush1.msra.mxu0 0.0
    %2738 = vmatprep.subr.mxu0 0.0
    %2739 = vmatpush1.msra.mxu0 0.0
    %2740 = vmatprep.subr.mxu0 0.0
    %2741 = vmatpush1.msra.mxu0 0.0
    %2742 = vmatprep.subr.mxu0 0.0
    %2743 = vmatpush1.msra.mxu0 0.0
    %2744 = vmatprep.subr.mxu0 0.0
    %2745 = vmatpush1.msra.mxu0 0.0
    %2746 = vmatprep.subr.mxu0 0.0
    %2747 = vmatpush1.msra.mxu0 0.0
    %2748 = vmatprep.subr.mxu0 0.0
    %2749 = vmatpush1.msra.mxu0 0.0
    %2750 = vmatprep.subr.mxu0 0.0
    %2751 = vmatpush1.msra.mxu0 0.0
    %2752 = vmatprep.subr.mxu0 0.0
    %2753 = vmatpush1.msra.mxu0 0.0
    %2754 = vmatprep.subr.mxu0 0.0
    %2755 = vmatpush1.msra.mxu0 0.0
    %2756 = vmatprep.subr.mxu0 0.0
    %2757 = vmatpush1.msra.mxu0 0.0
    %2758 = vmatprep.subr.mxu0 0.0
    %2759 = vmatpush1.msra.mxu0 0.0
    %2760 = vmatprep.subr.mxu0 0.0
    %2761 = vmatpush1.msra.mxu0 0.0
    %2762 = vmatprep.mubr.f32.mxu0 0.0
    %2763 = vmatmul.mubr.f32.gmra.mrb[0].mxu0 %v666
    %v2764 = vpop.f32.mrb[0].mxu0
    %v2765 = vadd.f32 0.0, %v2764
    %v2766 = vpop.f32.mrb[0].mxu0
    %2767 = vdwg.mxu0
    %v2768 = vmul.f32 %v735, %v735
    %v2769 = vmul.f32 %v805, %v805
    %v2770 = vmul.f32 %v875, %v875
    %v2771 = vmul.f32 %v945, %v945
    %v2772 = vmul.f32 %v1015, %v1015
    %v2773 = vmul.f32 %v1085, %v1085
    %v2774 = vmul.f32 %v1155, %v1155
    %v2775 = vmul.f32 %v1225, %v1225
    %v2776 = vmul.f32 %v1295, %v1295
    %v2777 = vmul.f32 %v1365, %v1365
    %v2778 = vmul.f32 %v1435, %v1435
    %v2779 = vmul.f32 %v1505, %v1505
    %v2780 = vmul.f32 %v735, %v1155
    %v2781 = vmul.f32 %v805, %v1225
    %v2782 = vmul.f32 %v875, %v1295
    %v2783 = vmul.f32 %v945, %v1365
    %v2784 = vmul.f32 %v1015, %v1435
    %v2785 = vmul.f32 %v1085, %v1505
    %v2786 = vsub.f32 %v1575, %v2768
    %v2787 = vsub.f32 %v1645, %v2769
    %v2788 = vsub.f32 %v1715, %v2770
    %v2789 = vsub.f32 %v1785, %v2771
    %v2790 = vsub.f32 %v1855, %v2772
    %v2791 = vsub.f32 %v1925, %v2773
    %v2792 = vsub.f32 %v1995, %v2774
    %v2793 = vsub.f32 %v2065, %v2775
    %v2794 = vsub.f32 %v2135, %v2776
    %v2795 = vsub.f32 %v2205, %v2777
    %v2796 = vsub.f32 %v2275, %v2778
    %v2797 = vsub.f32 %v2345, %v2779
    %v2798 = vsub.f32 %v2415, %v2780
    %v2799 = vsub.f32 %v2485, %v2781
    %v2800 = vsub.f32 %v2555, %v2782
    %v2801 = vsub.f32 %v2625, %v2783
    %v2802 = vsub.f32 %v2695, %v2784
    %v2803 = vsub.f32 %v2765, %v2785
    %v2804 = vmul.f32 %v2780, 2.0
    %v2805 = vmul.f32 %v2781, 2.0
    %v2806 = vmul.f32 %v2782, 2.0
    %v2807 = vmul.f32 %v2783, 2.0
    %v2808 = vmul.f32 %v2784, 2.0
    %v2809 = vmul.f32 %v2785, 2.0
    %v2810 = vadd.f32 %v2804, 6.5025
    %v2811 = vadd.f32 %v2805, 6.5025
    %v2812 = vadd.f32 %v2806, 6.5025
    %v2813 = vadd.f32 %v2807, 6.5025
    %v2814 = vadd.f32 %v2808, 6.5025
    %v2815 = vadd.f32 %v2809, 6.5025
    %v2816 = vmul.f32 %v2798, 2.0
    %v2817 = vmul.f32 %v2799, 2.0
    %v2818 = vmul.f32 %v2800, 2.0
    %v2819 = vmul.f32 %v2801, 2.0
    %v2820 = vmul.f32 %v2802, 2.0
    %v2821 = vmul.f32 %v2803, 2.0
    %v2822 = vadd.f32 %v2816, 58.5225
    %v2823 = vadd.f32 %v2817, 58.5225
    %v2824 = vadd.f32 %v2818, 58.5225
    %v2825 = vadd.f32 %v2819, 58.5225
    %v2826 = vadd.f32 %v2820, 58.5225
    %v2827 = vadd.f32 %v2821, 58.5225
    %v2828 = vmul.f32 %v2810, %v2822
    %v2829 = vmul.f32 %v2811, %v2823
    %v2830 = vmul.f32 %v2812, %v2824
    %v2831 = vmul.f32 %v2813, %v2825
    %v2832 = vmul.f32 %v2814, %v2826
    %v2833 = vmul.f32 %v2815, %v2827
    %v2834 = vadd.f32 %v2768, %v2774
    %v2835 = vadd.f32 %v2769, %v2775
    %v2836 = vadd.f32 %v2770, %v2776
    %v2837 = vadd.f32 %v2771, %v2777
    %v2838 = vadd.f32 %v2772, %v2778
    %v2839 = vadd.f32 %v2773, %v2779
    %v2840 = vadd.f32 %v2834, 6.5025
    %v2841 = vadd.f32 %v2835, 6.5025
    %v2842 = vadd.f32 %v2836, 6.5025
    %v2843 = vadd.f32 %v2837, 6.5025
    %v2844 = vadd.f32 %v2838, 6.5025
    %v2845 = vadd.f32 %v2839, 6.5025
    %v2846 = vadd.f32 %v2786, %v2792
    %v2847 = vadd.f32 %v2787, %v2793
    %v2848 = vadd.f32 %v2788, %v2794
    %v2849 = vadd.f32 %v2789, %v2795
    %v2850 = vadd.f32 %v2790, %v2796
    %v2851 = vadd.f32 %v2791, %v2797
    %v2852 = vadd.f32 %v2846, 58.5225
    %v2853 = vadd.f32 %v2847, 58.5225
    %v2854 = vadd.f32 %v2848, 58.5225
    %v2855 = vadd.f32 %v2849, 58.5225
    %v2856 = vadd.f32 %v2850, 58.5225
    %v2857 = vadd.f32 %v2851, 58.5225
    %v2858 = vmul.f32 %v2840, %v2852
    %v2859 = vmul.f32 %v2841, %v2853
    %v2860 = vmul.f32 %v2842, %v2854
    %v2861 = vmul.f32 %v2843, %v2855
    %v2862 = vmul.f32 %v2844, %v2856
    %v2863 = vmul.f32 %v2845, %v2857
    %v2864 = vrcp.pop %v2858
    %v2865 = vrcp.pop %v2859
    %v2866 = vrcp.pop %v2860
    %v2867 = vrcp.pop %v2861
    %v2868 = vrcp.pop %v2862
    %v2869 = vrcp.pop %v2863
    %v2870 = vmul.f32 %v2828, %v2864
    %v2871 = vmul.f32 %v2829, %v2865
    %v2872 = vmul.f32 %v2830, %v2866
    %v2873 = vmul.f32 %v2831, %v2867
    %v2874 = vmul.f32 %v2832, %v2868
    %v2875 = vmul.f32 %v2833, %v2869
    %vm2876 = vcmask 46080
    %v2877 = vsel %vm2876, %v2870, 0.0
    %2878 = vadd.xlane.f32.xlu0 %v2877
    %v2879 = vpop.xlane.xlu0 %2878
    %v2880 = vsel %vm2876, %v2871, 0.0
    %2881 = vadd.xlane.f32.xlu0 %v2880
    %v2882 = vpop.xlane.xlu0 %2881
    %v2883 = vsel %vm2876, %v2872, 0.0
    %2884 = vadd.xlane.f32.xlu0 %v2883
    %v2885 = vpop.xlane.xlu0 %2884
    %v2886 = vsel %vm2876, %v2873, 0.0
    %2887 = vadd.xlane.f32.xlu0 %v2886
    %v2888 = vpop.xlane.xlu0 %2887
    %v2889 = vsel %vm2876, %v2874, 0.0
    %2890 = vadd.xlane.f32.xlu0 %v2889
    %v2891 = vpop.xlane.xlu0 %2890
    %v2892 = vsel %vm2876, %v2875, 0.0
    %2893 = vadd.xlane.f32.xlu0 %v2892
    %v2894 = vpop.xlane.xlu0 %2893
    %vm2895 = vcmask 1045504
    %v2896 = vsel %vm2895, %v2879, 0.0
    %v2897 = vrot.slane %v2896, 4
    %v2898 = vadd.f32 %v2896, %v2897
    %v2899 = vrot.slane %v2898, 2
    %v2900 = vadd.f32 %v2898, %v2899
    %v2901 = vrot.slane %v2900, 1
    %v2902 = vadd.f32 %v2900, %v2901
    %v2903 = vsel %vm2895, %v2882, 0.0
    %v2904 = vrot.slane %v2903, 4
    %v2905 = vadd.f32 %v2903, %v2904
    %v2906 = vrot.slane %v2905, 2
    %v2907 = vadd.f32 %v2905, %v2906
    %v2908 = vrot.slane %v2907, 1
    %v2909 = vadd.f32 %v2907, %v2908
    %v2910 = vsel %vm2895, %v2885, 0.0
    %v2911 = vrot.slane %v2910, 4
    %v2912 = vadd.f32 %v2910, %v2911
    %v2913 = vrot.slane %v2912, 2
    %v2914 = vadd.f32 %v2912, %v2913
    %v2915 = vrot.slane %v2914, 1
    %v2916 = vadd.f32 %v2914, %v2915
    %v2917 = vsel %vm2895, %v2888, 0.0
    %v2918 = vrot.slane %v2917, 4
    %v2919 = vadd.f32 %v2917, %v2918
    %v2920 = vrot.slane %v2919, 2
    %v2921 = vadd.f32 %v2919, %v2920
    %v2922 = vrot.slane %v2921, 1
    %v2923 = vadd.f32 %v2921, %v2922
    %v2924 = vsel %vm2895, %v2891, 0.0
    %v2925 = vrot.slane %v2924, 4
    %v2926 = vadd.f32 %v2924, %v2925
    %v2927 = vrot.slane %v2926, 2
    %v2928 = vadd.f32 %v2926, %v2927
    %v2929 = vrot.slane %v2928, 1
    %v2930 = vadd.f32 %v2928, %v2929
    %v2931 = vsel %vm2895, %v2894, 0.0
    %v2932 = vrot.slane %v2931, 4
    %v2933 = vadd.f32 %v2931, %v2932
    %v2934 = vrot.slane %v2933, 2
    %v2935 = vadd.f32 %v2933, %v2934
    %v2936 = vrot.slane %v2935, 1
    %v2937 = vadd.f32 %v2935, %v2936
    %v2938 = vmul.f32 %v2902, 0.027777778
    %v2939 = vmul.f32 %v2909, 0.027777778
    %v2940 = vmul.f32 %v2916, 0.027777778
    %v2941 = vmul.f32 %v2923, 0.027777778
    %v2942 = vmul.f32 %v2930, 0.027777778
    %v2943 = vmul.f32 %v2937, 0.027777778
    %v2944 = vadd.f32 %v2938, %v2939
    %v2945 = vadd.f32 %v2944, %v2940
    %v2946 = vadd.f32 %v2945, %v2941
    %v2947 = vadd.f32 %v2946, %v2942
    %v2948 = vadd.f32 %v2947, %v2943
    %v2949 = vmul.f32 %v2948, 0.16666667
    %vm2950 = vcmask 0
    %2951 = vst.msk [vmem:[#allocation8] sm:$0x1] %vm2950, %v2949
    // Predicated region
    $region26: #{forward.1} parent=1 // pred_check
      _
    $region27: #{forward.1} parent=1 // pred_check_branch
      %2953 = sbr.rel (0) target = $region29
    $region28: #{forward.1} parent=1 // pred_region
      %s2955 = ssub.s32 16, 16
      %2956 = vsyncadd [#allocation4], %s2955
      %s2958 = sshll.u32 [#allocation8], 4
      %s2959 = int_to_ptr.vmem [resolvable:$true] %s2958
      %2961 = dma.vmem_to_hbm [thread:$0]  %s2959, 16, %s3, [#allocation4]
    $region29: #{forward.1} parent=1 // pred_fallthru
      _
    // Predicated region
    $region30: #{forward.1} parent=1 // pred_check
      _
    $region31: #{forward.1} parent=1 // pred_check_branch
      %2963 = sbr.rel (0) target = $region33
    $region32: #{forward.1} parent=1 // pred_region
      %2964 = dma.done [#allocation4], 16
    $region33: #{forward.1} parent=1 // pred_fallthru
      _
    %2965 = vsyncpa [#allocation3], 1
    %2966 = vsyncpa [#allocation6], 1
    %2967 = vsyncpa [#allocation4], 1

</llo_original>
